<compile_context>
chip_gen: v7x
topology: tpu7x:2x2x1
jax: 0.10.0
libtpu: 0.0.40
codegen_flags: <defaults>
</compile_context>

<pallas_src>
import functools

import jax
import jax.numpy as jnp
from jax.experimental import pallas as pl
from jax.experimental.pallas import tpu as pltpu

LANE = 128


def _round_up(x, m):
    return (x + m - 1) // m * m


def _pick_row_tile(ho, wo, cp, coutp, budget_bytes=4 << 20):
    """Largest output-row tile TH dividing Ho whose per-step compute working
    set fits `budget_bytes`, keeping the output block sublane dim (TH*Wo) a
    multiple of 8 (or equal to the full extent)."""
    def ok_shape(th):
        return th == ho or (th * wo) % 8 == 0

    def cost(th):
        rows = th * wo
        # f32 depthwise acc + bf16 flattened activations + double-buffered
        # f32 output block
        return rows * cp * 4 + rows * cp * 2 + 2 * rows * coutp * 4

    best = None
    for th in range(1, ho + 1):
        if ho % th == 0 and ok_shape(th) and cost(th) <= budget_bytes:
            best = th
    if best is not None:
        return best
    # nothing fits the budget cleanly; fall back to the smallest legal tile
    for th in range(1, ho + 1):
        if ho % th == 0 and ok_shape(th):
            return th
    return ho


def _dw_pw_kernel(x_ref, dww_ref, dwb_ref, pww_ref, pwb_ref, o_ref,
                  *, KH, KW, TH, Wo, sh, sw, Cp, Coutp):
    """Fused depthwise conv + BN + ReLU + pointwise 1x1 conv + BN + ReLU.

    Grid: (batch, Ho // TH).  Each step produces TH output rows.

    x_ref  : (Hp, Wp, Cp)       spatially + channel padded NHWC input (f32)
    dww_ref: (KH, KW, Cp)       depthwise filter, BN scale pre-folded (f32)
    dwb_ref: (1, Cp)            folded BN bias for the depthwise branch
    pww_ref: (Cp, Coutp) bf16   pointwise (1x1) filter, BN scale pre-folded
    pwb_ref: (1, Coutp)         folded BN bias for the pointwise branch
    o_ref  : (TH*Wo, Coutp)     lane-dense output slab (f32)
    """
    h = pl.program_id(1)
    HIN = (TH - 1) * sh + KH                       # input rows for TH out rows
    row0 = pl.multiple_of(h * (TH * sh), TH * sh)

    # load only the rows needed for this tile (halo included)
    xp = x_ref[pl.ds(row0, HIN), :, :]                          # (HIN, Wp, Cp)

    # hoist the depthwise-weight load out of the tap loops
    dww = dww_ref[...]                                          # (KH, KW, Cp)

    # ---- depthwise conv: accumulate KH*KW shifted windows (VPU, f32) ----
    acc = jnp.zeros((TH, Wo, Cp), jnp.float32)
    for kh in range(KH):                                        # static unroll
        row = xp[kh:kh + (TH - 1) * sh + 1:sh, :, :]            # (TH, Wp, Cp)
        for kw in range(KW):
            patch = row[:, kw:kw + (Wo - 1) * sw + 1:sw, :]     # (TH, Wo, Cp)
            acc = acc + patch * dww[kh, kw, :]

    # BN scale already folded into dww -> only bias + ReLU here (f32)
    dw_out = jnp.maximum(acc + dwb_ref[0], 0.0)

    # ---- pointwise 1x1 conv == (TH*Wo, Cp) x (Cp, Coutp) matmul (MXU, bf16) --
    flat = dw_out.reshape(TH * Wo, Cp).astype(jnp.bfloat16)
    pw = jnp.dot(flat, pww_ref[...], preferred_element_type=jnp.float32)
    pw = jnp.maximum(pw + pwb_ref[0], 0.0)

    o_ref[...] = pw.astype(o_ref.dtype)            # unmasked lane-dense store


def depth_and_pointwise_block(x_nchw, params, *, kernel_size, padding, stride):
    """Runs the fused depthwise-separable block.

    x_nchw : (N, C, H, W) float32  (PyTorch layout)
    returns: (N, Cout, Ho, Wo) float32
    """
    dw_w, dw_scale, dw_bias, pw_w, pw_scale, pw_bias = params
    N, C, H, W = x_nchw.shape
    KH, KW = kernel_size
    ph, pw_pad = padding
    sh, sw = stride
    Cout = pw_w.shape[1]

    Ho = (H + 2 * ph - KH) // sh + 1
    Wo = (W + 2 * pw_pad - KW) // sw + 1

    Cp = _round_up(C, LANE)
    Coutp = _round_up(Cout, LANE)

    TH = _pick_row_tile(Ho, Wo, Cp, Coutp)
    n_ht = Ho // TH

    # ---- layout glue (plain JAX): NCHW -> NHWC, spatial + channel zero-pad --
    # TODO(synk): keep the model NHWC end-to-end (or fold the transpose into
    # the kernel) to remove these extra HBM passes around the kernel.
    x_nhwc = jnp.transpose(x_nchw, (0, 2, 3, 1))
    x_pad = jnp.pad(x_nhwc, ((0, 0), (ph, ph), (pw_pad, pw_pad), (0, Cp - C)))
    Hp, Wp = x_pad.shape[1], x_pad.shape[2]

    # fold BN scale into the conv weights (eval-mode BN), channel-pad params;
    # padded channels produce exact zeros everywhere
    dw_w_f = dw_w * dw_scale[0]                   # (KH, KW, C) * (C,)
    pw_w_f = pw_w * pw_scale                      # (C, Cout) * (1, Cout)

    dw_w_p = jnp.pad(dw_w_f, ((0, 0), (0, 0), (0, Cp - C)))
    dw_bias_p = jnp.pad(dw_bias, ((0, 0), (0, Cp - C)))
    pw_w_p = jnp.pad(pw_w_f, ((0, Cp - C), (0, Coutp - Cout))).astype(
        jnp.bfloat16)
    pw_bias_p = jnp.pad(pw_bias, ((0, 0), (0, Coutp - Cout)))

    kernel = functools.partial(
        _dw_pw_kernel, KH=KH, KW=KW, TH=TH, Wo=Wo, sh=sh, sw=sw,
        Cp=Cp, Coutp=Coutp)

    out_flat = pl.pallas_call(
        kernel,
        out_shape=jax.ShapeDtypeStruct((N, Ho * Wo, Coutp), jnp.float32),
        grid_spec=pltpu.PrefetchScalarGridSpec(
            num_scalar_prefetch=0,
            grid=(N, n_ht),
            in_specs=[
                # batch dim squeezed; same input block across h tiles -> no
                # redundant re-DMA between consecutive h steps of one batch.
                pl.BlockSpec((None, Hp, Wp, Cp), lambda n, h: (n, 0, 0, 0)),
                pl.BlockSpec((KH, KW, Cp), lambda n, h: (0, 0, 0)),
                pl.BlockSpec((1, Cp), lambda n, h: (0, 0)),
                pl.BlockSpec((Cp, Coutp), lambda n, h: (0, 0)),
                pl.BlockSpec((1, Coutp), lambda n, h: (0, 0)),
            ],
            out_specs=pl.BlockSpec((None, TH * Wo, Coutp),
                                   lambda n, h: (n, h, 0)),
        ),
        compiler_params=pltpu.CompilerParams(
            dimension_semantics=("parallel", "parallel")),
    )(x_pad, dw_w_p, dw_bias_p, pw_w_p, pw_bias_p)

    out_nhwc = out_flat.reshape(N, Ho, Wo, Coutp)[..., :Cout]
    return jnp.transpose(out_nhwc, (0, 3, 1, 2))   # NHWC -> NCHW


def make_params(key, in_channels, point_wise_channels, kernel_size, eps=1e-5):
    """Deterministic synthetic parameters; BN (eval mode) folded into scale/bias."""
    KH, KW = kernel_size
    k1, k2, k3, k4 = jax.random.split(key, 4)

    # depthwise conv: PyTorch weight (C, 1, KH, KW) + bias (C)
    dw_w = 0.1 * jax.random.normal(k1, (KH, KW, in_channels), jnp.float32)
    dw_cb = 0.1 * jax.random.normal(k2, (in_channels,), jnp.float32)
    dw_gamma = jnp.ones((in_channels,), jnp.float32)
    dw_beta = jnp.zeros((in_channels,), jnp.float32)
    dw_mean = jnp.zeros((in_channels,), jnp.float32)
    dw_var = jnp.ones((in_channels,), jnp.float32)
    dw_scale = dw_gamma / jnp.sqrt(dw_var + eps)
    dw_bias = dw_scale * (dw_cb - dw_mean) + dw_beta

    # pointwise conv: PyTorch weight (Cout, Cin, 1, 1) + bias (Cout)
    pw_w = 0.1 * jax.random.normal(k3, (in_channels, point_wise_channels),
                                   jnp.float32)
    pw_cb = 0.1 * jax.random.normal(k4, (point_wise_channels,), jnp.float32)
    pw_gamma = jnp.ones((point_wise_channels,), jnp.float32)
    pw_beta = jnp.zeros((point_wise_channels,), jnp.float32)
    pw_mean = jnp.zeros((point_wise_channels,), jnp.float32)
    pw_var = jnp.ones((point_wise_channels,), jnp.float32)
    pw_scale = pw_gamma / jnp.sqrt(pw_var + eps)
    pw_bias = pw_scale * (pw_cb - pw_mean) + pw_beta

    return (dw_w, dw_scale.reshape(1, -1), dw_bias.reshape(1, -1),
            pw_w, pw_scale.reshape(1, -1), pw_bias.reshape(1, -1))


def _reference(x_nchw, params, *, kernel_size, padding, stride):
    """Pure-JAX reference (lax conv, f32) mirroring the PyTorch forward."""
    dw_w, dw_scale, dw_bias, pw_w, pw_scale, pw_bias = params
    C = x_nchw.shape[1]
    ph, pw_pad = padding
    dw_oihw = jnp.transpose(dw_w, (2, 0, 1))[:, None, :, :]
    y = jax.lax.conv_general_dilated(
        x_nchw, dw_oihw, window_strides=stride,
        padding=[(ph, ph), (pw_pad, pw_pad)], feature_group_count=C,
        dimension_numbers=('NCHW', 'OIHW', 'NCHW'))
    y = y * dw_scale[0][None, :, None, None] + dw_bias[0][None, :, None, None]
    y = jnp.maximum(y, 0.0)
    pw_oihw = jnp.transpose(pw_w, (1, 0))[:, :, None, None]
    z = jax.lax.conv_general_dilated(
        y, pw_oihw, window_strides=(1, 1), padding=[(0, 0), (0, 0)],
        dimension_numbers=('NCHW', 'OIHW', 'NCHW'))
    z = z * pw_scale[0][None, :, None, None] + pw_bias[0][None, :, None, None]
    return jnp.maximum(z, 0.0)


if __name__ == "__main__":
    # small shapes consistent with the module
    N, C, H, W = 2, 4, 16, 16
    point_wise_channels = 8
    kernel_size = (3, 3)
    padding = (1, 1)          # PyTorch padding=1
    depth_stride = (1, 1)

    key = jax.random.PRNGKey(0)
    kx, kp = jax.random.split(key)
    x = jax.random.normal(kx, (N, C, H, W), jnp.float32)
    params = make_params(kp, C, point_wise_channels, kernel_size)

    out = depth_and_pointwise_block(
        x, params, kernel_size=kernel_size, padding=padding,
        stride=depth_stride)
    out = jax.block_until_ready(out)

    ref = _reference(x, params, kernel_size=kernel_size, padding=padding,
                     stride=depth_stride)
    assert out.shape == (N, point_wise_channels, H, W)
    # pointwise matmul runs in bf16 on the MXU -> slightly looser tolerance
    assert jnp.allclose(out, ref, atol=1e-2, rtol=1e-2)

    print("KERNEL_OK")
</pallas_src>

<mosaic_0001>
module attributes {stable_mosaic.version = 11 : i64} {
  func.func @_dw_pw_kernel(%arg0: i32, %arg1: i32, %arg2: memref<1x18x18x128xf32, #tpu.memory_space<vmem>>, %arg3: memref<3x3x128xf32, #tpu.memory_space<vmem>>, %arg4: memref<1x128xf32, #tpu.memory_space<vmem>>, %arg5: memref<128x128xbf16, #tpu.memory_space<vmem>>, %arg6: memref<1x128xf32, #tpu.memory_space<vmem>>, %arg7: memref<1x256x128xf32, #tpu.memory_space<vmem>>) attributes {dimension_semantics = [#tpu.dimension_semantics<parallel>, #tpu.dimension_semantics<parallel>], iteration_bounds = array<i64: 2, 1>, scalar_prefetch = 0 : i64, scratch_operands = 0 : i64, tpu.core_type = #tpu.core_type<tc>, window_params = [{transform_indices = @transform_0, window_bounds = array<i64: 1, 18, 18, 128>}, {pipeline_mode = #tpu.pipeline_mode<synchronous>, transform_indices = @transform_1, window_bounds = array<i64: 3, 3, 128>}, {pipeline_mode = #tpu.pipeline_mode<synchronous>, transform_indices = @transform_2, window_bounds = array<i64: 1, 128>}, {pipeline_mode = #tpu.pipeline_mode<synchronous>, transform_indices = @transform_3, window_bounds = array<i64: 128, 128>}, {pipeline_mode = #tpu.pipeline_mode<synchronous>, transform_indices = @transform_4, window_bounds = array<i64: 1, 128>}, {transform_indices = @transform_5, window_bounds = array<i64: 1, 256, 128>}]} {
    %c16_i32 = arith.constant 16 : i32
    %0 = arith.muli %arg1, %c16_i32 : i32
    %1 = tpu.assume_multiple %0, 16 : i32
    %c0 = arith.constant 0 : index
    %2 = arith.index_cast %1 : i32 to index
    %c0_0 = arith.constant 0 : index
    %c0_1 = arith.constant 0 : index
    %3 = vector.load %arg2[%c0, %2, %c0_0, %c0_1] : memref<1x18x18x128xf32, #tpu.memory_space<vmem>>, vector<1x18x18x128xf32>
    %4 = vector.shape_cast %3 : vector<1x18x18x128xf32> to vector<18x18x128xf32>
    %c0_2 = arith.constant 0 : index
    %c0_3 = arith.constant 0 : index
    %c0_4 = arith.constant 0 : index
    %5 = vector.load %arg3[%c0_2, %c0_3, %c0_4] : memref<3x3x128xf32, #tpu.memory_space<vmem>>, vector<3x3x128xf32>
    %cst = arith.constant 0.000000e+00 : f32
    %6 = vector.broadcast %cst : f32 to vector<16x16x128xf32>
    %7 = vector.extract_strided_slice %4 {offsets = [0, 0, 0], sizes = [16, 18, 128], strides = [1, 1, 1]} : vector<18x18x128xf32> to vector<16x18x128xf32>
    %8 = vector.extract_strided_slice %7 {offsets = [0, 0, 0], sizes = [16, 16, 128], strides = [1, 1, 1]} : vector<16x18x128xf32> to vector<16x16x128xf32>
    %9 = vector.extract_strided_slice %5 {offsets = [0, 0, 0], sizes = [1, 1, 128], strides = [1, 1, 1]} : vector<3x3x128xf32> to vector<1x1x128xf32>
    %10 = vector.shape_cast %9 : vector<1x1x128xf32> to vector<128xf32>
    %11 = vector.shape_cast %10 : vector<128xf32> to vector<1x1x128xf32>
    %12 = vector.broadcast %11 : vector<1x1x128xf32> to vector<16x16x128xf32>
    %13 = arith.mulf %8, %12 : vector<16x16x128xf32>
    %14 = arith.addf %6, %13 : vector<16x16x128xf32>
    %15 = vector.extract_strided_slice %7 {offsets = [0, 1, 0], sizes = [16, 16, 128], strides = [1, 1, 1]} : vector<16x18x128xf32> to vector<16x16x128xf32>
    %16 = vector.extract_strided_slice %5 {offsets = [0, 1, 0], sizes = [1, 1, 128], strides = [1, 1, 1]} : vector<3x3x128xf32> to vector<1x1x128xf32>
    %17 = vector.shape_cast %16 : vector<1x1x128xf32> to vector<128xf32>
    %18 = vector.shape_cast %17 : vector<128xf32> to vector<1x1x128xf32>
    %19 = vector.broadcast %18 : vector<1x1x128xf32> to vector<16x16x128xf32>
    %20 = arith.mulf %15, %19 : vector<16x16x128xf32>
    %21 = arith.addf %14, %20 : vector<16x16x128xf32>
    %22 = vector.extract_strided_slice %7 {offsets = [0, 2, 0], sizes = [16, 16, 128], strides = [1, 1, 1]} : vector<16x18x128xf32> to vector<16x16x128xf32>
    %23 = vector.extract_strided_slice %5 {offsets = [0, 2, 0], sizes = [1, 1, 128], strides = [1, 1, 1]} : vector<3x3x128xf32> to vector<1x1x128xf32>
    %24 = vector.shape_cast %23 : vector<1x1x128xf32> to vector<128xf32>
    %25 = vector.shape_cast %24 : vector<128xf32> to vector<1x1x128xf32>
    %26 = vector.broadcast %25 : vector<1x1x128xf32> to vector<16x16x128xf32>
    %27 = arith.mulf %22, %26 : vector<16x16x128xf32>
    %28 = arith.addf %21, %27 : vector<16x16x128xf32>
    %29 = vector.extract_strided_slice %4 {offsets = [1, 0, 0], sizes = [16, 18, 128], strides = [1, 1, 1]} : vector<18x18x128xf32> to vector<16x18x128xf32>
    %30 = vector.extract_strided_slice %29 {offsets = [0, 0, 0], sizes = [16, 16, 128], strides = [1, 1, 1]} : vector<16x18x128xf32> to vector<16x16x128xf32>
    %31 = vector.extract_strided_slice %5 {offsets = [1, 0, 0], sizes = [1, 1, 128], strides = [1, 1, 1]} : vector<3x3x128xf32> to vector<1x1x128xf32>
    %32 = vector.shape_cast %31 : vector<1x1x128xf32> to vector<128xf32>
    %33 = vector.shape_cast %32 : vector<128xf32> to vector<1x1x128xf32>
    %34 = vector.broadcast %33 : vector<1x1x128xf32> to vector<16x16x128xf32>
    %35 = arith.mulf %30, %34 : vector<16x16x128xf32>
    %36 = arith.addf %28, %35 : vector<16x16x128xf32>
    %37 = vector.extract_strided_slice %29 {offsets = [0, 1, 0], sizes = [16, 16, 128], strides = [1, 1, 1]} : vector<16x18x128xf32> to vector<16x16x128xf32>
    %38 = vector.extract_strided_slice %5 {offsets = [1, 1, 0], sizes = [1, 1, 128], strides = [1, 1, 1]} : vector<3x3x128xf32> to vector<1x1x128xf32>
    %39 = vector.shape_cast %38 : vector<1x1x128xf32> to vector<128xf32>
    %40 = vector.shape_cast %39 : vector<128xf32> to vector<1x1x128xf32>
    %41 = vector.broadcast %40 : vector<1x1x128xf32> to vector<16x16x128xf32>
    %42 = arith.mulf %37, %41 : vector<16x16x128xf32>
    %43 = arith.addf %36, %42 : vector<16x16x128xf32>
    %44 = vector.extract_strided_slice %29 {offsets = [0, 2, 0], sizes = [16, 16, 128], strides = [1, 1, 1]} : vector<16x18x128xf32> to vector<16x16x128xf32>
    %45 = vector.extract_strided_slice %5 {offsets = [1, 2, 0], sizes = [1, 1, 128], strides = [1, 1, 1]} : vector<3x3x128xf32> to vector<1x1x128xf32>
    %46 = vector.shape_cast %45 : vector<1x1x128xf32> to vector<128xf32>
    %47 = vector.shape_cast %46 : vector<128xf32> to vector<1x1x128xf32>
    %48 = vector.broadcast %47 : vector<1x1x128xf32> to vector<16x16x128xf32>
    %49 = arith.mulf %44, %48 : vector<16x16x128xf32>
    %50 = arith.addf %43, %49 : vector<16x16x128xf32>
    %51 = vector.extract_strided_slice %4 {offsets = [2, 0, 0], sizes = [16, 18, 128], strides = [1, 1, 1]} : vector<18x18x128xf32> to vector<16x18x128xf32>
    %52 = vector.extract_strided_slice %51 {offsets = [0, 0, 0], sizes = [16, 16, 128], strides = [1, 1, 1]} : vector<16x18x128xf32> to vector<16x16x128xf32>
    %53 = vector.extract_strided_slice %5 {offsets = [2, 0, 0], sizes = [1, 1, 128], strides = [1, 1, 1]} : vector<3x3x128xf32> to vector<1x1x128xf32>
    %54 = vector.shape_cast %53 : vector<1x1x128xf32> to vector<128xf32>
    %55 = vector.shape_cast %54 : vector<128xf32> to vector<1x1x128xf32>
    %56 = vector.broadcast %55 : vector<1x1x128xf32> to vector<16x16x128xf32>
    %57 = arith.mulf %52, %56 : vector<16x16x128xf32>
    %58 = arith.addf %50, %57 : vector<16x16x128xf32>
    %59 = vector.extract_strided_slice %51 {offsets = [0, 1, 0], sizes = [16, 16, 128], strides = [1, 1, 1]} : vector<16x18x128xf32> to vector<16x16x128xf32>
    %60 = vector.extract_strided_slice %5 {offsets = [2, 1, 0], sizes = [1, 1, 128], strides = [1, 1, 1]} : vector<3x3x128xf32> to vector<1x1x128xf32>
    %61 = vector.shape_cast %60 : vector<1x1x128xf32> to vector<128xf32>
    %62 = vector.shape_cast %61 : vector<128xf32> to vector<1x1x128xf32>
    %63 = vector.broadcast %62 : vector<1x1x128xf32> to vector<16x16x128xf32>
    %64 = arith.mulf %59, %63 : vector<16x16x128xf32>
    %65 = arith.addf %58, %64 : vector<16x16x128xf32>
    %66 = vector.extract_strided_slice %51 {offsets = [0, 2, 0], sizes = [16, 16, 128], strides = [1, 1, 1]} : vector<16x18x128xf32> to vector<16x16x128xf32>
    %67 = vector.extract_strided_slice %5 {offsets = [2, 2, 0], sizes = [1, 1, 128], strides = [1, 1, 1]} : vector<3x3x128xf32> to vector<1x1x128xf32>
    %68 = vector.shape_cast %67 : vector<1x1x128xf32> to vector<128xf32>
    %69 = vector.shape_cast %68 : vector<128xf32> to vector<1x1x128xf32>
    %70 = vector.broadcast %69 : vector<1x1x128xf32> to vector<16x16x128xf32>
    %71 = arith.mulf %66, %70 : vector<16x16x128xf32>
    %72 = arith.addf %65, %71 : vector<16x16x128xf32>
    %c0_5 = arith.constant 0 : index
    %c0_6 = arith.constant 0 : index
    %73 = vector.load %arg4[%c0_5, %c0_6] : memref<1x128xf32, #tpu.memory_space<vmem>>, vector<1x128xf32>
    %74 = vector.shape_cast %73 : vector<1x128xf32> to vector<128xf32>
    %75 = vector.shape_cast %74 : vector<128xf32> to vector<1x1x128xf32>
    %76 = vector.broadcast %75 : vector<1x1x128xf32> to vector<16x16x128xf32>
    %77 = arith.addf %72, %76 : vector<16x16x128xf32>
    %cst_7 = arith.constant 0.000000e+00 : f32
    %78 = vector.broadcast %cst_7 : f32 to vector<16x16x128xf32>
    %79 = arith.maximumf %77, %78 : vector<16x16x128xf32>
    %80 = vector.shape_cast %79 : vector<16x16x128xf32> to vector<256x128xf32>
    %81 = arith.truncf %80 : vector<256x128xf32> to vector<256x128xbf16>
    %c0_8 = arith.constant 0 : index
    %c0_9 = arith.constant 0 : index
    %82 = vector.load %arg5[%c0_8, %c0_9] : memref<128x128xbf16, #tpu.memory_space<vmem>>, vector<128x128xbf16>
    %cst_10 = arith.constant dense<0.000000e+00> : vector<256x128xf32>
    %83 = tpu.matmul %81, %82, %cst_10 {dimension_numbers = #tpu.dot_dimension_numbers<[1], [0], [0], [1], [0, 0, 1, 1], [], []>} : vector<256x128xbf16>, vector<128x128xbf16>, vector<256x128xf32> -> vector<256x128xf32>
    %c0_11 = arith.constant 0 : index
    %c0_12 = arith.constant 0 : index
    %84 = vector.load %arg6[%c0_11, %c0_12] : memref<1x128xf32, #tpu.memory_space<vmem>>, vector<1x128xf32>
    %85 = vector.shape_cast %84 : vector<1x128xf32> to vector<128xf32>
    %86 = vector.shape_cast %85 : vector<128xf32> to vector<1x128xf32>
    %87 = vector.broadcast %86 : vector<1x128xf32> to vector<256x128xf32>
    %88 = arith.addf %83, %87 : vector<256x128xf32>
    %cst_13 = arith.constant 0.000000e+00 : f32
    %89 = vector.broadcast %cst_13 : f32 to vector<256x128xf32>
    %90 = arith.maximumf %88, %89 : vector<256x128xf32>
    %c0_14 = arith.constant 0 : index
    %c0_15 = arith.constant 0 : index
    %c0_16 = arith.constant 0 : index
    %91 = vector.load %arg7[%c0_14, %c0_15, %c0_16] : memref<1x256x128xf32, #tpu.memory_space<vmem>>, vector<1x256x128xf32>
    %92 = vector.shape_cast %91 : vector<1x256x128xf32> to vector<256x128xf32>
    %93 = vector.shape_cast %90 : vector<256x128xf32> to vector<1x256x128xf32>
    tpu.vector_store %arg7[%c0_14, %c0_15, %c0_16], %93 {strides = array<i32>} : memref<1x256x128xf32, #tpu.memory_space<vmem>>, vector<1x256x128xf32>,
    return
  }
  func.func @transform_0(%arg0: i32, %arg1: i32) -> (i32, i32, i32, i32) {
    %c0_i32 = arith.constant 0 : i32
    %c0_i32_0 = arith.constant 0 : i32
    %c0_i32_1 = arith.constant 0 : i32
    %c0_i32_2 = arith.constant 0 : i32
    return %arg0, %c0_i32, %c0_i32_0, %c0_i32_1 : i32, i32, i32, i32
  }
  func.func @transform_1(%arg0: i32, %arg1: i32) -> (i32, i32, i32) {
    %c0_i32 = arith.constant 0 : i32
    %c0_i32_0 = arith.constant 0 : i32
    %c0_i32_1 = arith.constant 0 : i32
    %c0_i32_2 = arith.constant 0 : i32
    return %c0_i32, %c0_i32_0, %c0_i32_1 : i32, i32, i32
  }
  func.func @transform_2(%arg0: i32, %arg1: i32) -> (i32, i32) {
    %c0_i32 = arith.constant 0 : i32
    %c0_i32_0 = arith.constant 0 : i32
    %c0_i32_1 = arith.constant 0 : i32
    return %c0_i32, %c0_i32_0 : i32, i32
  }
  func.func @transform_3(%arg0: i32, %arg1: i32) -> (i32, i32) {
    %c0_i32 = arith.constant 0 : i32
    %c0_i32_0 = arith.constant 0 : i32
    %c0_i32_1 = arith.constant 0 : i32
    return %c0_i32, %c0_i32_0 : i32, i32
  }
  func.func @transform_4(%arg0: i32, %arg1: i32) -> (i32, i32) {
    %c0_i32 = arith.constant 0 : i32
    %c0_i32_0 = arith.constant 0 : i32
    %c0_i32_1 = arith.constant 0 : i32
    return %c0_i32, %c0_i32_0 : i32, i32
  }
  func.func @transform_5(%arg0: i32, %arg1: i32) -> (i32, i32, i32) {
    %c0_i32 = arith.constant 0 : i32
    %c0_i32_0 = arith.constant 0 : i32
    return %arg0, %arg1, %c0_i32 : i32, i32, i32
  }
}

</mosaic_0001>

<llo_original>
// kernel: tpu_custom_call.1
$region0: #{tpu_custom_call.1}
  #allocation0 [shape = 'u32[]', space=smem, size = 0x4, offset = 0x4, fixed_abs, tag = 'smem constant byte address 0x4 - core index']
  #allocation1 [shape = 'u32[144,128]{1,0:T(1,128)}', space=vmem, size = 0x12000, scoped, tag = 'internal scratch']
  %s0 = inlined_call_operand.vmem [shape: f32[2,18,18,128], index: 0, kind: input, shape index: {}]
  %s1 = inlined_call_operand.vmem [shape: f32[3,3,128], index: 1, kind: input, shape index: {}]
  %s2 = inlined_call_operand.vmem [shape: f32[1,128], index: 2, kind: input, shape index: {}]
  %s3 = inlined_call_operand.vmem [shape: bf16[128,128], index: 3, kind: input, shape index: {}]
  %s4 = inlined_call_operand.vmem [shape: f32[1,128], index: 4, kind: input, shape index: {}]
  %s5 = inlined_call_operand.hbm [shape: f32[2,256,128], index: 5, kind: output, shape index: {}]
  %s6 = sld [smem:[#allocation0]]
  $region53: #{tpu_custom_call.1} parent=0
    _
  %s8 = ssub.s32 1, %s6
  %s9 = scalar_select 0, %s8, %s6
  $region1: #{tpu_custom_call.1} parent=0
    #allocation2 [shape = 'u8[262144]{0}', space=vmem, size = 0x40000, scoped, tag = 'output window, operand 0']
    #allocation3 [shape = 's32[2]{0}', space=sflag, size = 0x8, scoped, tag = 'scoped memory for tpu_custom_call.1']
    %10 = vsyncpa [#allocation3], 0
    %s11 = scalar_lea.sflag [#allocation3], 1
    %12 = vsyncpa %s11, 0
    loop: start=0, step=1, limit=4
    $region2: #{tpu_custom_call.1} parent=1 // loop_pre_header
      _
    $region3: #{tpu_custom_call.1} parent=1 // loop_header
      %s14 = sphi 0, %s18
      %p15 = scmp.ge.s32.totalorder %s14, 4
      %s21 = sphi 0, %s33
      %s22 = sphi 0, %s29
      %s23 = sphi 0, %s21
      %s24 = sphi 0, %s22
      %s25 = sphi 0, %s23
      %s26 = sphi 0, %s24
      %s36 = sphi 0, %s38
      %s39 = sphi 0, %s36
      %s40 = sphi 0, %s39
      %s56 = sphi 0, %s40
      %s60 = sphi 0, %s60
      %s62 = sphi 0, %s60
      %s63 = sphi 0, %s62
      %s77 = sphi 0, %s63
      %s81 = sphi 0, %s81
      %s83 = sphi 0, %s81
      %s84 = sphi 0, %s83
      %s98 = sphi 0, %s84
      %s102 = sphi 0, %s102
      %s104 = sphi 0, %s102
      %s105 = sphi 0, %s104
      %s119 = sphi 0, %s105
      %s123 = sphi 0, %s123
      %s125 = sphi 0, %s123
      %s126 = sphi 0, %s125
      %s140 = sphi 0, %s126
      %s148 = sphi 0, %s150
      %s151 = sphi 0, %s148
      %s152 = sphi 0, %s151
      %s168 = sphi 0, %s152
    $region4: #{tpu_custom_call.1} parent=1 // loop_header_branch
      %17 = sbr.rel (%p15) target = $region8
    $region5: #{tpu_custom_call.1} parent=1 // loop_body
      %s19 = ssub.s32 %s14, 1
      %s20 = ssub.s32 %s14, 2
      %s27 = sadd.s32 1, %s22
      %p28 = scmp.ge.s32.totalorder %s27, 1
      %s29 = scalar_select %p28, 0, %s27
      %s30 = sadd.s32 1, %s21
      %s31 = scalar_select %p28, %s30, %s21
      %p32 = scmp.ge.s32.totalorder %s31, 2
      %s33 = scalar_select %p32, 0, %s31
      %s34 = ssub.s32 %s21, %s33
      %p35 = scmp.eq.s32.totalorder %s34, 0
      %s37 = sadd.s32 %s36, 1
      %s38 = scalar_select %p35, %s36, %s37
      %p41 = pneg %p35
      %p42 = scmp.eq.s32.totalorder %s14, 1
      %p43 = por %p41, %p42
      %p44 = scmp.ne.s32.totalorder %s36, %s39
      %p45 = scmp.eq.s32.totalorder %s14, 0
      %p46 = por %p44, %p45
      %p47 = scmp.ne.s32.totalorder %s36, %s39
      %p48 = scmp.eq.s32.totalorder %s19, 1
      %p49 = por %p47, %p48
      %p50 = scmp.ne.s32.totalorder %s39, %s40
      %p51 = scmp.eq.s32.totalorder %s19, 0
      %p52 = por %p50, %p51
      %p53 = scmp.ne.s32.totalorder %s39, %s40
      %p54 = scmp.eq.s32.totalorder %s20, 1
      %p55 = por %p53, %p54
      %p57 = scmp.ne.s32.totalorder %s40, %s56
      %p58 = scmp.eq.s32.totalorder %s20, 0
      %p59 = por %p57, %p58
      %s61 = sadd.s32 %s60, 1
      %p64 = scmp.eq.s32.totalorder %s14, 1
      %p65 = scmp.ne.s32.totalorder %s60, %s62
      %p66 = scmp.eq.s32.totalorder %s14, 0
      %p67 = por %p65, %p66
      %p68 = scmp.ne.s32.totalorder %s60, %s62
      %p69 = scmp.eq.s32.totalorder %s19, 1
      %p70 = por %p68, %p69
      %p71 = scmp.ne.s32.totalorder %s62, %s63
      %p72 = scmp.eq.s32.totalorder %s19, 0
      %p73 = por %p71, %p72
      %p74 = scmp.ne.s32.totalorder %s62, %s63
      %p75 = scmp.eq.s32.totalorder %s20, 1
      %p76 = por %p74, %p75
      %p78 = scmp.ne.s32.totalorder %s63, %s77
      %p79 = scmp.eq.s32.totalorder %s20, 0
      %p80 = por %p78, %p79
      %s82 = sadd.s32 %s81, 1
      %p85 = scmp.eq.s32.totalorder %s14, 1
      %p86 = scmp.ne.s32.totalorder %s81, %s83
      %p87 = scmp.eq.s32.totalorder %s14, 0
      %p88 = por %p86, %p87
      %p89 = scmp.ne.s32.totalorder %s81, %s83
      %p90 = scmp.eq.s32.totalorder %s19, 1
      %p91 = por %p89, %p90
      %p92 = scmp.ne.s32.totalorder %s83, %s84
      %p93 = scmp.eq.s32.totalorder %s19, 0
      %p94 = por %p92, %p93
      %p95 = scmp.ne.s32.totalorder %s83, %s84
      %p96 = scmp.eq.s32.totalorder %s20, 1
      %p97 = por %p95, %p96
      %p99 = scmp.ne.s32.totalorder %s84, %s98
      %p100 = scmp.eq.s32.totalorder %s20, 0
      %p101 = por %p99, %p100
      %s103 = sadd.s32 %s102, 1
      %p106 = scmp.eq.s32.totalorder %s14, 1
      %p107 = scmp.ne.s32.totalorder %s102, %s104
      %p108 = scmp.eq.s32.totalorder %s14, 0
      %p109 = por %p107, %p108
      %p110 = scmp.ne.s32.totalorder %s102, %s104
      %p111 = scmp.eq.s32.totalorder %s19, 1
      %p112 = por %p110, %p111
      %p113 = scmp.ne.s32.totalorder %s104, %s105
      %p114 = scmp.eq.s32.totalorder %s19, 0
      %p115 = por %p113, %p114
      %p116 = scmp.ne.s32.totalorder %s104, %s105
      %p117 = scmp.eq.s32.totalorder %s20, 1
      %p118 = por %p116, %p117
      %p120 = scmp.ne.s32.totalorder %s105, %s119
      %p121 = scmp.eq.s32.totalorder %s20, 0
      %p122 = por %p120, %p121
      %s124 = sadd.s32 %s123, 1
      %p127 = scmp.eq.s32.totalorder %s14, 1
      %p128 = scmp.ne.s32.totalorder %s123, %s125
      %p129 = scmp.eq.s32.totalorder %s14, 0
      %p130 = por %p128, %p129
      %p131 = scmp.ne.s32.totalorder %s123, %s125
      %p132 = scmp.eq.s32.totalorder %s19, 1
      %p133 = por %p131, %p132
      %p134 = scmp.ne.s32.totalorder %s125, %s126
      %p135 = scmp.eq.s32.totalorder %s19, 0
      %p136 = por %p134, %p135
      %p137 = scmp.ne.s32.totalorder %s125, %s126
      %p138 = scmp.eq.s32.totalorder %s20, 1
      %p139 = por %p137, %p138
      %p141 = scmp.ne.s32.totalorder %s126, %s140
      %p142 = scmp.eq.s32.totalorder %s20, 0
      %p143 = por %p141, %p142
      %s144 = ssub.s32 %s21, %s33
      %s145 = ssub.s32 %s22, %s29
      %s146 = sor.u32 %s144, %s145
      %p147 = scmp.eq.s32.totalorder %s146, 0
      %s149 = sadd.s32 %s148, 1
      %s150 = scalar_select %p147, %s148, %s149
      %p153 = pneg %p147
      %p154 = scmp.eq.s32.totalorder %s14, 1
      %p155 = por %p153, %p154
      %p156 = scmp.ne.s32.totalorder %s148, %s151
      %p157 = scmp.eq.s32.totalorder %s14, 0
      %p158 = por %p156, %p157
      %p159 = scmp.ne.s32.totalorder %s148, %s151
      %p160 = scmp.eq.s32.totalorder %s19, 1
      %p161 = por %p159, %p160
      %p162 = scmp.ne.s32.totalorder %s151, %s152
      %p163 = scmp.eq.s32.totalorder %s19, 0
      %p164 = por %p162, %p163
      %p165 = scmp.ne.s32.totalorder %s151, %s152
      %p166 = scmp.eq.s32.totalorder %s20, 1
      %p167 = por %p165, %p166
      %p169 = scmp.ne.s32.totalorder %s152, %s168
      %p170 = scmp.eq.s32.totalorder %s20, 0
      %p171 = por %p169, %p170
      %p172 = scmp.le.s32.totalorder 1, %s14
      %p173 = scmp.lt.s32.totalorder %s14, 3
      %p174 = pnand %p172, %p173
      %p175 = pneg %p174
      // Predicated region
      $region9: #{tpu_custom_call.1} parent=5 // pred_check
        _
      $region10: #{tpu_custom_call.1} parent=5 // pred_check_branch
        %177 = sbr.rel (%p174) target = $region12
      $region11: #{tpu_custom_call.1} parent=5 // pred_region
        %s178 = ssub.s32 %s14, 1
        // Predicated region
        $region13: #{tpu_custom_call.1} parent=11 // pred_check
          %p179 = pneg %p73
        $region14: #{tpu_custom_call.1} parent=11 // pred_check_branch
          %181 = sbr.rel (%p179) target = $region16
        $region15: #{tpu_custom_call.1} parent=11 // pred_region
          _
        $region16: #{tpu_custom_call.1} parent=11 // pred_fallthru
          _
        // Predicated region
        $region17: #{tpu_custom_call.1} parent=11 // pred_check
          %p182 = pneg %p94
        $region18: #{tpu_custom_call.1} parent=11 // pred_check_branch
          %184 = sbr.rel (%p182) target = $region20
        $region19: #{tpu_custom_call.1} parent=11 // pred_region
          _
        $region20: #{tpu_custom_call.1} parent=11 // pred_fallthru
          _
        // Predicated region
        $region21: #{tpu_custom_call.1} parent=11 // pred_check
          %p185 = pneg %p115
        $region22: #{tpu_custom_call.1} parent=11 // pred_check_branch
          %187 = sbr.rel (%p185) target = $region24
        $region23: #{tpu_custom_call.1} parent=11 // pred_region
          _
        $region24: #{tpu_custom_call.1} parent=11 // pred_fallthru
          _
        // Predicated region
        $region25: #{tpu_custom_call.1} parent=11 // pred_check
          %p188 = pneg %p136
        $region26: #{tpu_custom_call.1} parent=11 // pred_check_branch
          %190 = sbr.rel (%p188) target = $region28
        $region27: #{tpu_custom_call.1} parent=11 // pred_region
          _
        $region28: #{tpu_custom_call.1} parent=11 // pred_fallthru
          _
      $region12: #{tpu_custom_call.1} parent=5 // pred_fallthru
        _
      %p191 = scmp.lt.s32.totalorder %s14, 2
      // Predicated region
      $region29: #{tpu_custom_call.1} parent=5 // pred_check
        %p192 = pneg %p191
      $region30: #{tpu_custom_call.1} parent=5 // pred_check_branch
        %194 = sbr.rel (%p192) target = $region32
      $region31: #{tpu_custom_call.1} parent=5 // pred_region
        // Predicated region
        $region33: #{tpu_custom_call.1} parent=31 // pred_check
          %p195 = pneg %p46
        $region34: #{tpu_custom_call.1} parent=31 // pred_check_branch
          %197 = sbr.rel (%p195) target = $region36
        $region35: #{tpu_custom_call.1} parent=31 // pred_region
          %p198 = scmp.lt.s32.totalorder %s21, 1
          %s199 = scalar_select %p198, %s21, 1
          %s200 = smul.addr %s199, 54
          %s201 = smul.addr %s200, 8
          %s202 = scalar_lea.vmem %s0, %s201
        $region36: #{tpu_custom_call.1} parent=31 // pred_fallthru
          _
      $region32: #{tpu_custom_call.1} parent=5 // pred_fallthru
        _
      %p203 = scmp.le.s32.totalorder 1, %s14
      %p204 = scmp.lt.s32.totalorder %s14, 3
      %p205 = pnand %p203, %p204
      %p206 = pneg %p205
      // Predicated region
      $region37: #{tpu_custom_call.1} parent=5 // pred_check
        _
      $region38: #{tpu_custom_call.1} parent=5 // pred_check_branch
        %208 = sbr.rel (%p205) target = $region40
      $region39: #{tpu_custom_call.1} parent=5 // pred_region
        %s209 = ssub.s32 %s14, 1
        %p210 = scmp.lt.s32.totalorder %s23, 1
        %s211 = scalar_select %p210, %s23, 1
        %s212 = smul.addr %s211, 54
        %s213 = smul.addr %s212, 8
        %s214 = scalar_lea.vmem %s0, %s213
        %p215 = pneg %p52
        %p216 = pneg %p49
        %p217 = pneg %p73
        %p218 = pneg %p70
        %p219 = pneg %p94
        %p220 = pneg %p91
        %p221 = pneg %p115
        %p222 = pneg %p112
        %p223 = pneg %p136
        %p224 = pneg %p133
        %p225 = pneg %p164
        %p226 = pneg %p161
        %s227 = sand.u32 %s151, 1
        %s228 = scalar_lea.sflag [#allocation3], %s227
        %s229 = sand.u32 %s151, 1
        %s230 = smul.addr %s229, 256
        %s231 = scalar_lea.vmem [#allocation2], %s230
        %p232 = scmp.lt.s32.totalorder %s23, 1
        %s233 = scalar_select %p232, %s23, 1
        %s234 = smul.addr %s233, 54
        %s235 = smul.addr %s234, 8
        %s236 = scalar_lea.vmem %s0, %s235
        %s237 = smul.u32 32, %s24
        %s239 = smul.u32 %s24, 16
        %s240 = smul.u32 %s239, 24
        %s241 = scalar_lea.vmem %s236, %s240
        %v242 = vld [vmem:[%s241] sm:$0xff]
        %v243 = vld [vmem:[%s241 + $0x8] sm:$0xff]
        %v244 = vld [vmem:[%s241 + $0x10] sm:$0x3]
        %v245 = vld [vmem:[%s241 + $0x18] sm:$0xff]
        %v246 = vld [vmem:[%s241 + $0x20] sm:$0xff]
        %v247 = vld [vmem:[%s241 + $0x28] sm:$0x3]
        %v248 = vld [vmem:[%s241 + $0x30] sm:$0xff]
        %v249 = vld [vmem:[%s241 + $0x38] sm:$0xff]
        %v250 = vld [vmem:[%s241 + $0x40] sm:$0x3]
        %v251 = vld [vmem:[%s241 + $0x48] sm:$0xff]
        %v252 = vld [vmem:[%s241 + $0x50] sm:$0xff]
        %v253 = vld [vmem:[%s241 + $0x58] sm:$0x3]
        %v254 = vld [vmem:[%s241 + $0x60] sm:$0xff]
        %v255 = vld [vmem:[%s241 + $0x68] sm:$0xff]
        %v256 = vld [vmem:[%s241 + $0x70] sm:$0x3]
        %v257 = vld [vmem:[%s241 + $0x78] sm:$0xff]
        %v258 = vld [vmem:[%s241 + $0x80] sm:$0xff]
        %v259 = vld [vmem:[%s241 + $0x88] sm:$0x3]
        %v260 = vld [vmem:[%s241 + $0x90] sm:$0xff]
        %v261 = vld [vmem:[%s241 + $0x98] sm:$0xff]
        %v262 = vld [vmem:[%s241 + $0xa0] sm:$0x3]
        %v263 = vld [vmem:[%s241 + $0xa8] sm:$0xff]
        %v264 = vld [vmem:[%s241 + $0xb0] sm:$0xff]
        %v265 = vld [vmem:[%s241 + $0xb8] sm:$0x3]
        %v266 = vld [vmem:[%s241 + $0xc0] sm:$0xff]
        %v267 = vld [vmem:[%s241 + $0xc8] sm:$0xff]
        %v268 = vld [vmem:[%s241 + $0xd0] sm:$0x3]
        %v269 = vld [vmem:[%s241 + $0xd8] sm:$0xff]
        %v270 = vld [vmem:[%s241 + $0xe0] sm:$0xff]
        %v271 = vld [vmem:[%s241 + $0xe8] sm:$0x3]
        %v272 = vld [vmem:[%s241 + $0xf0] sm:$0xff]
        %v273 = vld [vmem:[%s241 + $0xf8] sm:$0xff]
        %v274 = vld [vmem:[%s241 + $0x100] sm:$0x3]
        %v275 = vld [vmem:[%s241 + $0x108] sm:$0xff]
        %v276 = vld [vmem:[%s241 + $0x110] sm:$0xff]
        %v277 = vld [vmem:[%s241 + $0x118] sm:$0x3]
        %v278 = vld [vmem:[%s241 + $0x120] sm:$0xff]
        %v279 = vld [vmem:[%s241 + $0x128] sm:$0xff]
        %v280 = vld [vmem:[%s241 + $0x130] sm:$0x3]
        %v281 = vld [vmem:[%s241 + $0x138] sm:$0xff]
        %v282 = vld [vmem:[%s241 + $0x140] sm:$0xff]
        %v283 = vld [vmem:[%s241 + $0x148] sm:$0x3]
        %v284 = vld [vmem:[%s241 + $0x150] sm:$0xff]
        %v285 = vld [vmem:[%s241 + $0x158] sm:$0xff]
        %v286 = vld [vmem:[%s241 + $0x160] sm:$0x3]
        %v287 = vld [vmem:[%s241 + $0x168] sm:$0xff]
        %v288 = vld [vmem:[%s241 + $0x170] sm:$0xff]
        %v289 = vld [vmem:[%s241 + $0x178] sm:$0x3]
        %v290 = vld [vmem:[%s241 + $0x180] sm:$0xff]
        %v291 = vld [vmem:[%s241 + $0x188] sm:$0xff]
        %v292 = vld [vmem:[%s241 + $0x190] sm:$0x3]
        %v293 = vld [vmem:[%s241 + $0x198] sm:$0xff]
        %v294 = vld [vmem:[%s241 + $0x1a0] sm:$0xff]
        %v295 = vld [vmem:[%s241 + $0x1a8] sm:$0x3]
        %v296 = vld [vmem:[%s1] sm:$0x7]
        %v297 = vld [vmem:[%s1 + $0x4] sm:$0x7]
        %v298 = vld [vmem:[%s1 + $0x8] sm:$0x7]
        %v299 = vlaneseq
        %v300 = vshrl.u32 %v299, 7
        %v301 = vsub.s32 0, %v300
        %v302 = vrot.slane %v296, %v301
        %v303 = vmul.f32 %v242, %v302
        %v304 = vmul.f32 %v243, %v302
        %v305 = vmul.f32 %v245, %v302
        %v306 = vmul.f32 %v246, %v302
        %v307 = vmul.f32 %v248, %v302
        %v308 = vmul.f32 %v249, %v302
        %v309 = vmul.f32 %v251, %v302
        %v310 = vmul.f32 %v252, %v302
        %v311 = vmul.f32 %v254, %v302
        %v312 = vmul.f32 %v255, %v302
        %v313 = vmul.f32 %v257, %v302
        %v314 = vmul.f32 %v258, %v302
        %v315 = vmul.f32 %v260, %v302
        %v316 = vmul.f32 %v261, %v302
        %v317 = vmul.f32 %v263, %v302
        %v318 = vmul.f32 %v264, %v302
        %v319 = vmul.f32 %v266, %v302
        %v320 = vmul.f32 %v267, %v302
        %v321 = vmul.f32 %v269, %v302
        %v322 = vmul.f32 %v270, %v302
        %v323 = vmul.f32 %v272, %v302
        %v324 = vmul.f32 %v273, %v302
        %v325 = vmul.f32 %v275, %v302
        %v326 = vmul.f32 %v276, %v302
        %v327 = vmul.f32 %v278, %v302
        %v328 = vmul.f32 %v279, %v302
        %v329 = vmul.f32 %v281, %v302
        %v330 = vmul.f32 %v282, %v302
        %v331 = vmul.f32 %v284, %v302
        %v332 = vmul.f32 %v285, %v302
        %v333 = vmul.f32 %v287, %v302
        %v334 = vmul.f32 %v288, %v302
        %v335 = vadd.f32 %v303, 0.0
        %v336 = vadd.f32 %v304, 0.0
        %v337 = vadd.f32 %v305, 0.0
        %v338 = vadd.f32 %v306, 0.0
        %v339 = vadd.f32 %v307, 0.0
        %v340 = vadd.f32 %v308, 0.0
        %v341 = vadd.f32 %v309, 0.0
        %v342 = vadd.f32 %v310, 0.0
        %v343 = vadd.f32 %v311, 0.0
        %v344 = vadd.f32 %v312, 0.0
        %v345 = vadd.f32 %v313, 0.0
        %v346 = vadd.f32 %v314, 0.0
        %v347 = vadd.f32 %v315, 0.0
        %v348 = vadd.f32 %v316, 0.0
        %v349 = vadd.f32 %v317, 0.0
        %v350 = vadd.f32 %v318, 0.0
        %v351 = vadd.f32 %v319, 0.0
        %v352 = vadd.f32 %v320, 0.0
        %v353 = vadd.f32 %v321, 0.0
        %v354 = vadd.f32 %v322, 0.0
        %v355 = vadd.f32 %v323, 0.0
        %v356 = vadd.f32 %v324, 0.0
        %v357 = vadd.f32 %v325, 0.0
        %v358 = vadd.f32 %v326, 0.0
        %v359 = vadd.f32 %v327, 0.0
        %v360 = vadd.f32 %v328, 0.0
        %v361 = vadd.f32 %v329, 0.0
        %v362 = vadd.f32 %v330, 0.0
        %v363 = vadd.f32 %v331, 0.0
        %v364 = vadd.f32 %v332, 0.0
        %v365 = vadd.f32 %v333, 0.0
        %v366 = vadd.f32 %v334, 0.0
        %v367 = vlaneseq
        %v368 = vshrl.u32 %v367, 7
        %v369 = vsub.s32 1, %v368
        %v370 = vrot.slane %v296, %v369
        %v371 = vmul.f32 %v242, %v370
        %v372 = vmul.f32 %v243, %v370
        %v373 = vmul.f32 %v244, %v370
        %v374 = vmul.f32 %v245, %v370
        %v375 = vmul.f32 %v246, %v370
        %v376 = vmul.f32 %v247, %v370
        %v377 = vmul.f32 %v248, %v370
        %v378 = vmul.f32 %v249, %v370
        %v379 = vmul.f32 %v250, %v370
        %v380 = vmul.f32 %v251, %v370
        %v381 = vmul.f32 %v252, %v370
        %v382 = vmul.f32 %v253, %v370
        %v383 = vmul.f32 %v254, %v370
        %v384 = vmul.f32 %v255, %v370
        %v385 = vmul.f32 %v256, %v370
        %v386 = vmul.f32 %v257, %v370
        %v387 = vmul.f32 %v258, %v370
        %v388 = vmul.f32 %v259, %v370
        %v389 = vmul.f32 %v260, %v370
        %v390 = vmul.f32 %v261, %v370
        %v391 = vmul.f32 %v262, %v370
        %v392 = vmul.f32 %v263, %v370
        %v393 = vmul.f32 %v264, %v370
        %v394 = vmul.f32 %v265, %v370
        %v395 = vmul.f32 %v266, %v370
        %v396 = vmul.f32 %v267, %v370
        %v397 = vmul.f32 %v268, %v370
        %v398 = vmul.f32 %v269, %v370
        %v399 = vmul.f32 %v270, %v370
        %v400 = vmul.f32 %v271, %v370
        %v401 = vmul.f32 %v272, %v370
        %v402 = vmul.f32 %v273, %v370
        %v403 = vmul.f32 %v274, %v370
        %v404 = vmul.f32 %v275, %v370
        %v405 = vmul.f32 %v276, %v370
        %v406 = vmul.f32 %v277, %v370
        %v407 = vmul.f32 %v278, %v370
        %v408 = vmul.f32 %v279, %v370
        %v409 = vmul.f32 %v280, %v370
        %v410 = vmul.f32 %v281, %v370
        %v411 = vmul.f32 %v282, %v370
        %v412 = vmul.f32 %v283, %v370
        %v413 = vmul.f32 %v284, %v370
        %v414 = vmul.f32 %v285, %v370
        %v415 = vmul.f32 %v286, %v370
        %v416 = vmul.f32 %v287, %v370
        %v417 = vmul.f32 %v288, %v370
        %v418 = vmul.f32 %v289, %v370
        %vm467 = vcmask 1046528
        %v468 = vrot.slane %v371, 1
        %v469 = vrot.slane %v372, 1
        %v470 = vsel %vm467, %v468, %v469
        %v471 = vrot.slane %v373, 1
        %v472 = vsel %vm467, %v469, %v471
        %v473 = vrot.slane %v374, 1
        %v474 = vrot.slane %v375, 1
        %v475 = vsel %vm467, %v473, %v474
        %v476 = vrot.slane %v376, 1
        %v477 = vsel %vm467, %v474, %v476
        %v478 = vrot.slane %v377, 1
        %v479 = vrot.slane %v378, 1
        %v480 = vsel %vm467, %v478, %v479
        %v481 = vrot.slane %v379, 1
        %v482 = vsel %vm467, %v479, %v481
        %v483 = vrot.slane %v380, 1
        %v484 = vrot.slane %v381, 1
        %v485 = vsel %vm467, %v483, %v484
        %v486 = vrot.slane %v382, 1
        %v487 = vsel %vm467, %v484, %v486
        %v488 = vrot.slane %v383, 1
        %v489 = vrot.slane %v384, 1
        %v490 = vsel %vm467, %v488, %v489
        %v491 = vrot.slane %v385, 1
        %v492 = vsel %vm467, %v489, %v491
        %v493 = vrot.slane %v386, 1
        %v494 = vrot.slane %v387, 1
        %v495 = vsel %vm467, %v493, %v494
        %v496 = vrot.slane %v388, 1
        %v497 = vsel %vm467, %v494, %v496
        %v498 = vrot.slane %v389, 1
        %v499 = vrot.slane %v390, 1
        %v500 = vsel %vm467, %v498, %v499
        %v501 = vrot.slane %v391, 1
        %v502 = vsel %vm467, %v499, %v501
        %v503 = vrot.slane %v392, 1
        %v504 = vrot.slane %v393, 1
        %v505 = vsel %vm467, %v503, %v504
        %v506 = vrot.slane %v394, 1
        %v507 = vsel %vm467, %v504, %v506
        %v508 = vrot.slane %v395, 1
        %v509 = vrot.slane %v396, 1
        %v510 = vsel %vm467, %v508, %v509
        %v511 = vrot.slane %v397, 1
        %v512 = vsel %vm467, %v509, %v511
        %v513 = vrot.slane %v398, 1
        %v514 = vrot.slane %v399, 1
        %v515 = vsel %vm467, %v513, %v514
        %v516 = vrot.slane %v400, 1
        %v517 = vsel %vm467, %v514, %v516
        %v518 = vrot.slane %v401, 1
        %v519 = vrot.slane %v402, 1
        %v520 = vsel %vm467, %v518, %v519
        %v521 = vrot.slane %v403, 1
        %v522 = vsel %vm467, %v519, %v521
        %v523 = vrot.slane %v404, 1
        %v524 = vrot.slane %v405, 1
        %v525 = vsel %vm467, %v523, %v524
        %v526 = vrot.slane %v406, 1
        %v527 = vsel %vm467, %v524, %v526
        %v528 = vrot.slane %v407, 1
        %v529 = vrot.slane %v408, 1
        %v530 = vsel %vm467, %v528, %v529
        %v531 = vrot.slane %v409, 1
        %v532 = vsel %vm467, %v529, %v531
        %v533 = vrot.slane %v410, 1
        %v534 = vrot.slane %v411, 1
        %v535 = vsel %vm467, %v533, %v534
        %v536 = vrot.slane %v412, 1
        %v537 = vsel %vm467, %v534, %v536
        %v538 = vrot.slane %v413, 1
        %v539 = vrot.slane %v414, 1
        %v540 = vsel %vm467, %v538, %v539
        %v541 = vrot.slane %v415, 1
        %v542 = vsel %vm467, %v539, %v541
        %v543 = vrot.slane %v416, 1
        %v544 = vrot.slane %v417, 1
        %v545 = vsel %vm467, %v543, %v544
        %v546 = vrot.slane %v418, 1
        %v547 = vsel %vm467, %v544, %v546
        %v580 = vadd.f32 %v335, %v470
        %v581 = vadd.f32 %v336, %v472
        %v582 = vadd.f32 %v337, %v475
        %v583 = vadd.f32 %v338, %v477
        %v584 = vadd.f32 %v339, %v480
        %v585 = vadd.f32 %v340, %v482
        %v586 = vadd.f32 %v341, %v485
        %v587 = vadd.f32 %v342, %v487
        %v588 = vadd.f32 %v343, %v490
        %v589 = vadd.f32 %v344, %v492
        %v590 = vadd.f32 %v345, %v495
        %v591 = vadd.f32 %v346, %v497
        %v592 = vadd.f32 %v347, %v500
        %v593 = vadd.f32 %v348, %v502
        %v594 = vadd.f32 %v349, %v505
        %v595 = vadd.f32 %v350, %v507
        %v596 = vadd.f32 %v351, %v510
        %v597 = vadd.f32 %v352, %v512
        %v598 = vadd.f32 %v353, %v515
        %v599 = vadd.f32 %v354, %v517
        %v600 = vadd.f32 %v355, %v520
        %v601 = vadd.f32 %v356, %v522
        %v602 = vadd.f32 %v357, %v525
        %v603 = vadd.f32 %v358, %v527
        %v604 = vadd.f32 %v359, %v530
        %v605 = vadd.f32 %v360, %v532
        %v606 = vadd.f32 %v361, %v535
        %v607 = vadd.f32 %v362, %v537
        %v608 = vadd.f32 %v363, %v540
        %v609 = vadd.f32 %v364, %v542
        %v610 = vadd.f32 %v365, %v545
        %v611 = vadd.f32 %v366, %v547
        %v612 = vlaneseq
        %v613 = vshrl.u32 %v612, 7
        %v614 = vsub.s32 2, %v613
        %v615 = vrot.slane %v296, %v614
        %v616 = vmul.f32 %v242, %v615
        %v617 = vmul.f32 %v243, %v615
        %v618 = vmul.f32 %v244, %v615
        %v619 = vmul.f32 %v245, %v615
        %v620 = vmul.f32 %v246, %v615
        %v621 = vmul.f32 %v247, %v615
        %v622 = vmul.f32 %v248, %v615
        %v623 = vmul.f32 %v249, %v615
        %v624 = vmul.f32 %v250, %v615
        %v625 = vmul.f32 %v251, %v615
        %v626 = vmul.f32 %v252, %v615
        %v627 = vmul.f32 %v253, %v615
        %v628 = vmul.f32 %v254, %v615
        %v629 = vmul.f32 %v255, %v615
        %v630 = vmul.f32 %v256, %v615
        %v631 = vmul.f32 %v257, %v615
        %v632 = vmul.f32 %v258, %v615
        %v633 = vmul.f32 %v259, %v615
        %v634 = vmul.f32 %v260, %v615
        %v635 = vmul.f32 %v261, %v615
        %v636 = vmul.f32 %v262, %v615
        %v637 = vmul.f32 %v263, %v615
        %v638 = vmul.f32 %v264, %v615
        %v639 = vmul.f32 %v265, %v615
        %v640 = vmul.f32 %v266, %v615
        %v641 = vmul.f32 %v267, %v615
        %v642 = vmul.f32 %v268, %v615
        %v643 = vmul.f32 %v269, %v615
        %v644 = vmul.f32 %v270, %v615
        %v645 = vmul.f32 %v271, %v615
        %v646 = vmul.f32 %v272, %v615
        %v647 = vmul.f32 %v273, %v615
        %v648 = vmul.f32 %v274, %v615
        %v649 = vmul.f32 %v275, %v615
        %v650 = vmul.f32 %v276, %v615
        %v651 = vmul.f32 %v277, %v615
        %v652 = vmul.f32 %v278, %v615
        %v653 = vmul.f32 %v279, %v615
        %v654 = vmul.f32 %v280, %v615
        %v655 = vmul.f32 %v281, %v615
        %v656 = vmul.f32 %v282, %v615
        %v657 = vmul.f32 %v283, %v615
        %v658 = vmul.f32 %v284, %v615
        %v659 = vmul.f32 %v285, %v615
        %v660 = vmul.f32 %v286, %v615
        %v661 = vmul.f32 %v287, %v615
        %v662 = vmul.f32 %v288, %v615
        %v663 = vmul.f32 %v289, %v615
        %vm712 = vcmask 1045504
        %v713 = vrot.slane %v616, 2
        %v714 = vrot.slane %v617, 2
        %v715 = vsel %vm712, %v713, %v714
        %v716 = vrot.slane %v618, 2
        %v717 = vsel %vm712, %v714, %v716
        %v718 = vrot.slane %v619, 2
        %v719 = vrot.slane %v620, 2
        %v720 = vsel %vm712, %v718, %v719
        %v721 = vrot.slane %v621, 2
        %v722 = vsel %vm712, %v719, %v721
        %v723 = vrot.slane %v622, 2
        %v724 = vrot.slane %v623, 2
        %v725 = vsel %vm712, %v723, %v724
        %v726 = vrot.slane %v624, 2
        %v727 = vsel %vm712, %v724, %v726
        %v728 = vrot.slane %v625, 2
        %v729 = vrot.slane %v626, 2
        %v730 = vsel %vm712, %v728, %v729
        %v731 = vrot.slane %v627, 2
        %v732 = vsel %vm712, %v729, %v731
        %v733 = vrot.slane %v628, 2
        %v734 = vrot.slane %v629, 2
        %v735 = vsel %vm712, %v733, %v734
        %v736 = vrot.slane %v630, 2
        %v737 = vsel %vm712, %v734, %v736
        %v738 = vrot.slane %v631, 2
        %v739 = vrot.slane %v632, 2
        %v740 = vsel %vm712, %v738, %v739
        %v741 = vrot.slane %v633, 2
        %v742 = vsel %vm712, %v739, %v741
        %v743 = vrot.slane %v634, 2
        %v744 = vrot.slane %v635, 2
        %v745 = vsel %vm712, %v743, %v744
        %v746 = vrot.slane %v636, 2
        %v747 = vsel %vm712, %v744, %v746
        %v748 = vrot.slane %v637, 2
        %v749 = vrot.slane %v638, 2
        %v750 = vsel %vm712, %v748, %v749
        %v751 = vrot.slane %v639, 2
        %v752 = vsel %vm712, %v749, %v751
        %v753 = vrot.slane %v640, 2
        %v754 = vrot.slane %v641, 2
        %v755 = vsel %vm712, %v753, %v754
        %v756 = vrot.slane %v642, 2
        %v757 = vsel %vm712, %v754, %v756
        %v758 = vrot.slane %v643, 2
        %v759 = vrot.slane %v644, 2
        %v760 = vsel %vm712, %v758, %v759
        %v761 = vrot.slane %v645, 2
        %v762 = vsel %vm712, %v759, %v761
        %v763 = vrot.slane %v646, 2
        %v764 = vrot.slane %v647, 2
        %v765 = vsel %vm712, %v763, %v764
        %v766 = vrot.slane %v648, 2
        %v767 = vsel %vm712, %v764, %v766
        %v768 = vrot.slane %v649, 2
        %v769 = vrot.slane %v650, 2
        %v770 = vsel %vm712, %v768, %v769
        %v771 = vrot.slane %v651, 2
        %v772 = vsel %vm712, %v769, %v771
        %v773 = vrot.slane %v652, 2
        %v774 = vrot.slane %v653, 2
        %v775 = vsel %vm712, %v773, %v774
        %v776 = vrot.slane %v654, 2
        %v777 = vsel %vm712, %v774, %v776
        %v778 = vrot.slane %v655, 2
        %v779 = vrot.slane %v656, 2
        %v780 = vsel %vm712, %v778, %v779
        %v781 = vrot.slane %v657, 2
        %v782 = vsel %vm712, %v779, %v781
        %v783 = vrot.slane %v658, 2
        %v784 = vrot.slane %v659, 2
        %v785 = vsel %vm712, %v783, %v784
        %v786 = vrot.slane %v660, 2
        %v787 = vsel %vm712, %v784, %v786
        %v788 = vrot.slane %v661, 2
        %v789 = vrot.slane %v662, 2
        %v790 = vsel %vm712, %v788, %v789
        %v791 = vrot.slane %v663, 2
        %v792 = vsel %vm712, %v789, %v791
        %v825 = vadd.f32 %v580, %v715
        %v826 = vadd.f32 %v581, %v717
        %v827 = vadd.f32 %v582, %v720
        %v828 = vadd.f32 %v583, %v722
        %v829 = vadd.f32 %v584, %v725
        %v830 = vadd.f32 %v585, %v727
        %v831 = vadd.f32 %v586, %v730
        %v832 = vadd.f32 %v587, %v732
        %v833 = vadd.f32 %v588, %v735
        %v834 = vadd.f32 %v589, %v737
        %v835 = vadd.f32 %v590, %v740
        %v836 = vadd.f32 %v591, %v742
        %v837 = vadd.f32 %v592, %v745
        %v838 = vadd.f32 %v593, %v747
        %v839 = vadd.f32 %v594, %v750
        %v840 = vadd.f32 %v595, %v752
        %v841 = vadd.f32 %v596, %v755
        %v842 = vadd.f32 %v597, %v757
        %v843 = vadd.f32 %v598, %v760
        %v844 = vadd.f32 %v599, %v762
        %v845 = vadd.f32 %v600, %v765
        %v846 = vadd.f32 %v601, %v767
        %v847 = vadd.f32 %v602, %v770
        %v848 = vadd.f32 %v603, %v772
        %v849 = vadd.f32 %v604, %v775
        %v850 = vadd.f32 %v605, %v777
        %v851 = vadd.f32 %v606, %v780
        %v852 = vadd.f32 %v607, %v782
        %v853 = vadd.f32 %v608, %v785
        %v854 = vadd.f32 %v609, %v787
        %v855 = vadd.f32 %v610, %v790
        %v856 = vadd.f32 %v611, %v792
        %v857 = vlaneseq
        %v858 = vshrl.u32 %v857, 7
        %v859 = vsub.s32 0, %v858
        %v860 = vrot.slane %v297, %v859
        %v861 = vmul.f32 %v245, %v860
        %v862 = vmul.f32 %v246, %v860
        %v863 = vmul.f32 %v248, %v860
        %v864 = vmul.f32 %v249, %v860
        %v865 = vmul.f32 %v251, %v860
        %v866 = vmul.f32 %v252, %v860
        %v867 = vmul.f32 %v254, %v860
        %v868 = vmul.f32 %v255, %v860
        %v869 = vmul.f32 %v257, %v860
        %v870 = vmul.f32 %v258, %v860
        %v871 = vmul.f32 %v260, %v860
        %v872 = vmul.f32 %v261, %v860
        %v873 = vmul.f32 %v263, %v860
        %v874 = vmul.f32 %v264, %v860
        %v875 = vmul.f32 %v266, %v860
        %v876 = vmul.f32 %v267, %v860
        %v877 = vmul.f32 %v269, %v860
        %v878 = vmul.f32 %v270, %v860
        %v879 = vmul.f32 %v272, %v860
        %v880 = vmul.f32 %v273, %v860
        %v881 = vmul.f32 %v275, %v860
        %v882 = vmul.f32 %v276, %v860
        %v883 = vmul.f32 %v278, %v860
        %v884 = vmul.f32 %v279, %v860
        %v885 = vmul.f32 %v281, %v860
        %v886 = vmul.f32 %v282, %v860
        %v887 = vmul.f32 %v284, %v860
        %v888 = vmul.f32 %v285, %v860
        %v889 = vmul.f32 %v287, %v860
        %v890 = vmul.f32 %v288, %v860
        %v891 = vmul.f32 %v290, %v860
        %v892 = vmul.f32 %v291, %v860
        %v893 = vadd.f32 %v825, %v861
        %v894 = vadd.f32 %v826, %v862
        %v895 = vadd.f32 %v827, %v863
        %v896 = vadd.f32 %v828, %v864
        %v897 = vadd.f32 %v829, %v865
        %v898 = vadd.f32 %v830, %v866
        %v899 = vadd.f32 %v831, %v867
        %v900 = vadd.f32 %v832, %v868
        %v901 = vadd.f32 %v833, %v869
        %v902 = vadd.f32 %v834, %v870
        %v903 = vadd.f32 %v835, %v871
        %v904 = vadd.f32 %v836, %v872
        %v905 = vadd.f32 %v837, %v873
        %v906 = vadd.f32 %v838, %v874
        %v907 = vadd.f32 %v839, %v875
        %v908 = vadd.f32 %v840, %v876
        %v909 = vadd.f32 %v841, %v877
        %v910 = vadd.f32 %v842, %v878
        %v911 = vadd.f32 %v843, %v879
        %v912 = vadd.f32 %v844, %v880
        %v913 = vadd.f32 %v845, %v881
        %v914 = vadd.f32 %v846, %v882
        %v915 = vadd.f32 %v847, %v883
        %v916 = vadd.f32 %v848, %v884
        %v917 = vadd.f32 %v849, %v885
        %v918 = vadd.f32 %v850, %v886
        %v919 = vadd.f32 %v851, %v887
        %v920 = vadd.f32 %v852, %v888
        %v921 = vadd.f32 %v853, %v889
        %v922 = vadd.f32 %v854, %v890
        %v923 = vadd.f32 %v855, %v891
        %v924 = vadd.f32 %v856, %v892
        %v925 = vlaneseq
        %v926 = vshrl.u32 %v925, 7
        %v927 = vsub.s32 1, %v926
        %v928 = vrot.slane %v297, %v927
        %v929 = vmul.f32 %v245, %v928
        %v930 = vmul.f32 %v246, %v928
        %v931 = vmul.f32 %v247, %v928
        %v932 = vmul.f32 %v248, %v928
        %v933 = vmul.f32 %v249, %v928
        %v934 = vmul.f32 %v250, %v928
        %v935 = vmul.f32 %v251, %v928
        %v936 = vmul.f32 %v252, %v928
        %v937 = vmul.f32 %v253, %v928
        %v938 = vmul.f32 %v254, %v928
        %v939 = vmul.f32 %v255, %v928
        %v940 = vmul.f32 %v256, %v928
        %v941 = vmul.f32 %v257, %v928
        %v942 = vmul.f32 %v258, %v928
        %v943 = vmul.f32 %v259, %v928
        %v944 = vmul.f32 %v260, %v928
        %v945 = vmul.f32 %v261, %v928
        %v946 = vmul.f32 %v262, %v928
        %v947 = vmul.f32 %v263, %v928
        %v948 = vmul.f32 %v264, %v928
        %v949 = vmul.f32 %v265, %v928
        %v950 = vmul.f32 %v266, %v928
        %v951 = vmul.f32 %v267, %v928
        %v952 = vmul.f32 %v268, %v928
        %v953 = vmul.f32 %v269, %v928
        %v954 = vmul.f32 %v270, %v928
        %v955 = vmul.f32 %v271, %v928
        %v956 = vmul.f32 %v272, %v928
        %v957 = vmul.f32 %v273, %v928
        %v958 = vmul.f32 %v274, %v928
        %v959 = vmul.f32 %v275, %v928
        %v960 = vmul.f32 %v276, %v928
        %v961 = vmul.f32 %v277, %v928
        %v962 = vmul.f32 %v278, %v928
        %v963 = vmul.f32 %v279, %v928
        %v964 = vmul.f32 %v280, %v928
        %v965 = vmul.f32 %v281, %v928
        %v966 = vmul.f32 %v282, %v928
        %v967 = vmul.f32 %v283, %v928
        %v968 = vmul.f32 %v284, %v928
        %v969 = vmul.f32 %v285, %v928
        %v970 = vmul.f32 %v286, %v928
        %v971 = vmul.f32 %v287, %v928
        %v972 = vmul.f32 %v288, %v928
        %v973 = vmul.f32 %v289, %v928
        %v974 = vmul.f32 %v290, %v928
        %v975 = vmul.f32 %v291, %v928
        %v976 = vmul.f32 %v292, %v928
        %v1025 = vrot.slane %v929, 1
        %v1026 = vrot.slane %v930, 1
        %v1027 = vsel %vm467, %v1025, %v1026
        %v1028 = vrot.slane %v931, 1
        %v1029 = vsel %vm467, %v1026, %v1028
        %v1030 = vrot.slane %v932, 1
        %v1031 = vrot.slane %v933, 1
        %v1032 = vsel %vm467, %v1030, %v1031
        %v1033 = vrot.slane %v934, 1
        %v1034 = vsel %vm467, %v1031, %v1033
        %v1035 = vrot.slane %v935, 1
        %v1036 = vrot.slane %v936, 1
        %v1037 = vsel %vm467, %v1035, %v1036
        %v1038 = vrot.slane %v937, 1
        %v1039 = vsel %vm467, %v1036, %v1038
        %v1040 = vrot.slane %v938, 1
        %v1041 = vrot.slane %v939, 1
        %v1042 = vsel %vm467, %v1040, %v1041
        %v1043 = vrot.slane %v940, 1
        %v1044 = vsel %vm467, %v1041, %v1043
        %v1045 = vrot.slane %v941, 1
        %v1046 = vrot.slane %v942, 1
        %v1047 = vsel %vm467, %v1045, %v1046
        %v1048 = vrot.slane %v943, 1
        %v1049 = vsel %vm467, %v1046, %v1048
        %v1050 = vrot.slane %v944, 1
        %v1051 = vrot.slane %v945, 1
        %v1052 = vsel %vm467, %v1050, %v1051
        %v1053 = vrot.slane %v946, 1
        %v1054 = vsel %vm467, %v1051, %v1053
        %v1055 = vrot.slane %v947, 1
        %v1056 = vrot.slane %v948, 1
        %v1057 = vsel %vm467, %v1055, %v1056
        %v1058 = vrot.slane %v949, 1
        %v1059 = vsel %vm467, %v1056, %v1058
        %v1060 = vrot.slane %v950, 1
        %v1061 = vrot.slane %v951, 1
        %v1062 = vsel %vm467, %v1060, %v1061
        %v1063 = vrot.slane %v952, 1
        %v1064 = vsel %vm467, %v1061, %v1063
        %v1065 = vrot.slane %v953, 1
        %v1066 = vrot.slane %v954, 1
        %v1067 = vsel %vm467, %v1065, %v1066
        %v1068 = vrot.slane %v955, 1
        %v1069 = vsel %vm467, %v1066, %v1068
        %v1070 = vrot.slane %v956, 1
        %v1071 = vrot.slane %v957, 1
        %v1072 = vsel %vm467, %v1070, %v1071
        %v1073 = vrot.slane %v958, 1
        %v1074 = vsel %vm467, %v1071, %v1073
        %v1075 = vrot.slane %v959, 1
        %v1076 = vrot.slane %v960, 1
        %v1077 = vsel %vm467, %v1075, %v1076
        %v1078 = vrot.slane %v961, 1
        %v1079 = vsel %vm467, %v1076, %v1078
        %v1080 = vrot.slane %v962, 1
        %v1081 = vrot.slane %v963, 1
        %v1082 = vsel %vm467, %v1080, %v1081
        %v1083 = vrot.slane %v964, 1
        %v1084 = vsel %vm467, %v1081, %v1083
        %v1085 = vrot.slane %v965, 1
        %v1086 = vrot.slane %v966, 1
        %v1087 = vsel %vm467, %v1085, %v1086
        %v1088 = vrot.slane %v967, 1
        %v1089 = vsel %vm467, %v1086, %v1088
        %v1090 = vrot.slane %v968, 1
        %v1091 = vrot.slane %v969, 1
        %v1092 = vsel %vm467, %v1090, %v1091
        %v1093 = vrot.slane %v970, 1
        %v1094 = vsel %vm467, %v1091, %v1093
        %v1095 = vrot.slane %v971, 1
        %v1096 = vrot.slane %v972, 1
        %v1097 = vsel %vm467, %v1095, %v1096
        %v1098 = vrot.slane %v973, 1
        %v1099 = vsel %vm467, %v1096, %v1098
        %v1100 = vrot.slane %v974, 1
        %v1101 = vrot.slane %v975, 1
        %v1102 = vsel %vm467, %v1100, %v1101
        %v1103 = vrot.slane %v976, 1
        %v1104 = vsel %vm467, %v1101, %v1103
        %v1137 = vadd.f32 %v893, %v1027
        %v1138 = vadd.f32 %v894, %v1029
        %v1139 = vadd.f32 %v895, %v1032
        %v1140 = vadd.f32 %v896, %v1034
        %v1141 = vadd.f32 %v897, %v1037
        %v1142 = vadd.f32 %v898, %v1039
        %v1143 = vadd.f32 %v899, %v1042
        %v1144 = vadd.f32 %v900, %v1044
        %v1145 = vadd.f32 %v901, %v1047
        %v1146 = vadd.f32 %v902, %v1049
        %v1147 = vadd.f32 %v903, %v1052
        %v1148 = vadd.f32 %v904, %v1054
        %v1149 = vadd.f32 %v905, %v1057
        %v1150 = vadd.f32 %v906, %v1059
        %v1151 = vadd.f32 %v907, %v1062
        %v1152 = vadd.f32 %v908, %v1064
        %v1153 = vadd.f32 %v909, %v1067
        %v1154 = vadd.f32 %v910, %v1069
        %v1155 = vadd.f32 %v911, %v1072
        %v1156 = vadd.f32 %v912, %v1074
        %v1157 = vadd.f32 %v913, %v1077
        %v1158 = vadd.f32 %v914, %v1079
        %v1159 = vadd.f32 %v915, %v1082
        %v1160 = vadd.f32 %v916, %v1084
        %v1161 = vadd.f32 %v917, %v1087
        %v1162 = vadd.f32 %v918, %v1089
        %v1163 = vadd.f32 %v919, %v1092
        %v1164 = vadd.f32 %v920, %v1094
        %v1165 = vadd.f32 %v921, %v1097
        %v1166 = vadd.f32 %v922, %v1099
        %v1167 = vadd.f32 %v923, %v1102
        %v1168 = vadd.f32 %v924, %v1104
        %v1169 = vlaneseq
        %v1170 = vshrl.u32 %v1169, 7
        %v1171 = vsub.s32 2, %v1170
        %v1172 = vrot.slane %v297, %v1171
        %v1173 = vmul.f32 %v245, %v1172
        %v1174 = vmul.f32 %v246, %v1172
        %v1175 = vmul.f32 %v247, %v1172
        %v1176 = vmul.f32 %v248, %v1172
        %v1177 = vmul.f32 %v249, %v1172
        %v1178 = vmul.f32 %v250, %v1172
        %v1179 = vmul.f32 %v251, %v1172
        %v1180 = vmul.f32 %v252, %v1172
        %v1181 = vmul.f32 %v253, %v1172
        %v1182 = vmul.f32 %v254, %v1172
        %v1183 = vmul.f32 %v255, %v1172
        %v1184 = vmul.f32 %v256, %v1172
        %v1185 = vmul.f32 %v257, %v1172
        %v1186 = vmul.f32 %v258, %v1172
        %v1187 = vmul.f32 %v259, %v1172
        %v1188 = vmul.f32 %v260, %v1172
        %v1189 = vmul.f32 %v261, %v1172
        %v1190 = vmul.f32 %v262, %v1172
        %v1191 = vmul.f32 %v263, %v1172
        %v1192 = vmul.f32 %v264, %v1172
        %v1193 = vmul.f32 %v265, %v1172
        %v1194 = vmul.f32 %v266, %v1172
        %v1195 = vmul.f32 %v267, %v1172
        %v1196 = vmul.f32 %v268, %v1172
        %v1197 = vmul.f32 %v269, %v1172
        %v1198 = vmul.f32 %v270, %v1172
        %v1199 = vmul.f32 %v271, %v1172
        %v1200 = vmul.f32 %v272, %v1172
        %v1201 = vmul.f32 %v273, %v1172
        %v1202 = vmul.f32 %v274, %v1172
        %v1203 = vmul.f32 %v275, %v1172
        %v1204 = vmul.f32 %v276, %v1172
        %v1205 = vmul.f32 %v277, %v1172
        %v1206 = vmul.f32 %v278, %v1172
        %v1207 = vmul.f32 %v279, %v1172
        %v1208 = vmul.f32 %v280, %v1172
        %v1209 = vmul.f32 %v281, %v1172
        %v1210 = vmul.f32 %v282, %v1172
        %v1211 = vmul.f32 %v283, %v1172
        %v1212 = vmul.f32 %v284, %v1172
        %v1213 = vmul.f32 %v285, %v1172
        %v1214 = vmul.f32 %v286, %v1172
        %v1215 = vmul.f32 %v287, %v1172
        %v1216 = vmul.f32 %v288, %v1172
        %v1217 = vmul.f32 %v289, %v1172
        %v1218 = vmul.f32 %v290, %v1172
        %v1219 = vmul.f32 %v291, %v1172
        %v1220 = vmul.f32 %v292, %v1172
        %v1269 = vrot.slane %v1173, 2
        %v1270 = vrot.slane %v1174, 2
        %v1271 = vsel %vm712, %v1269, %v1270
        %v1272 = vrot.slane %v1175, 2
        %v1273 = vsel %vm712, %v1270, %v1272
        %v1274 = vrot.slane %v1176, 2
        %v1275 = vrot.slane %v1177, 2
        %v1276 = vsel %vm712, %v1274, %v1275
        %v1277 = vrot.slane %v1178, 2
        %v1278 = vsel %vm712, %v1275, %v1277
        %v1279 = vrot.slane %v1179, 2
        %v1280 = vrot.slane %v1180, 2
        %v1281 = vsel %vm712, %v1279, %v1280
        %v1282 = vrot.slane %v1181, 2
        %v1283 = vsel %vm712, %v1280, %v1282
        %v1284 = vrot.slane %v1182, 2
        %v1285 = vrot.slane %v1183, 2
        %v1286 = vsel %vm712, %v1284, %v1285
        %v1287 = vrot.slane %v1184, 2
        %v1288 = vsel %vm712, %v1285, %v1287
        %v1289 = vrot.slane %v1185, 2
        %v1290 = vrot.slane %v1186, 2
        %v1291 = vsel %vm712, %v1289, %v1290
        %v1292 = vrot.slane %v1187, 2
        %v1293 = vsel %vm712, %v1290, %v1292
        %v1294 = vrot.slane %v1188, 2
        %v1295 = vrot.slane %v1189, 2
        %v1296 = vsel %vm712, %v1294, %v1295
        %v1297 = vrot.slane %v1190, 2
        %v1298 = vsel %vm712, %v1295, %v1297
        %v1299 = vrot.slane %v1191, 2
        %v1300 = vrot.slane %v1192, 2
        %v1301 = vsel %vm712, %v1299, %v1300
        %v1302 = vrot.slane %v1193, 2
        %v1303 = vsel %vm712, %v1300, %v1302
        %v1304 = vrot.slane %v1194, 2
        %v1305 = vrot.slane %v1195, 2
        %v1306 = vsel %vm712, %v1304, %v1305
        %v1307 = vrot.slane %v1196, 2
        %v1308 = vsel %vm712, %v1305, %v1307
        %v1309 = vrot.slane %v1197, 2
        %v1310 = vrot.slane %v1198, 2
        %v1311 = vsel %vm712, %v1309, %v1310
        %v1312 = vrot.slane %v1199, 2
        %v1313 = vsel %vm712, %v1310, %v1312
        %v1314 = vrot.slane %v1200, 2
        %v1315 = vrot.slane %v1201, 2
        %v1316 = vsel %vm712, %v1314, %v1315
        %v1317 = vrot.slane %v1202, 2
        %v1318 = vsel %vm712, %v1315, %v1317
        %v1319 = vrot.slane %v1203, 2
        %v1320 = vrot.slane %v1204, 2
        %v1321 = vsel %vm712, %v1319, %v1320
        %v1322 = vrot.slane %v1205, 2
        %v1323 = vsel %vm712, %v1320, %v1322
        %v1324 = vrot.slane %v1206, 2
        %v1325 = vrot.slane %v1207, 2
        %v1326 = vsel %vm712, %v1324, %v1325
        %v1327 = vrot.slane %v1208, 2
        %v1328 = vsel %vm712, %v1325, %v1327
        %v1329 = vrot.slane %v1209, 2
        %v1330 = vrot.slane %v1210, 2
        %v1331 = vsel %vm712, %v1329, %v1330
        %v1332 = vrot.slane %v1211, 2
        %v1333 = vsel %vm712, %v1330, %v1332
        %v1334 = vrot.slane %v1212, 2
        %v1335 = vrot.slane %v1213, 2
        %v1336 = vsel %vm712, %v1334, %v1335
        %v1337 = vrot.slane %v1214, 2
        %v1338 = vsel %vm712, %v1335, %v1337
        %v1339 = vrot.slane %v1215, 2
        %v1340 = vrot.slane %v1216, 2
        %v1341 = vsel %vm712, %v1339, %v1340
        %v1342 = vrot.slane %v1217, 2
        %v1343 = vsel %vm712, %v1340, %v1342
        %v1344 = vrot.slane %v1218, 2
        %v1345 = vrot.slane %v1219, 2
        %v1346 = vsel %vm712, %v1344, %v1345
        %v1347 = vrot.slane %v1220, 2
        %v1348 = vsel %vm712, %v1345, %v1347
        %v1381 = vadd.f32 %v1137, %v1271
        %v1382 = vadd.f32 %v1138, %v1273
        %v1383 = vadd.f32 %v1139, %v1276
        %v1384 = vadd.f32 %v1140, %v1278
        %v1385 = vadd.f32 %v1141, %v1281
        %v1386 = vadd.f32 %v1142, %v1283
        %v1387 = vadd.f32 %v1143, %v1286
        %v1388 = vadd.f32 %v1144, %v1288
        %v1389 = vadd.f32 %v1145, %v1291
        %v1390 = vadd.f32 %v1146, %v1293
        %v1391 = vadd.f32 %v1147, %v1296
        %v1392 = vadd.f32 %v1148, %v1298
        %v1393 = vadd.f32 %v1149, %v1301
        %v1394 = vadd.f32 %v1150, %v1303
        %v1395 = vadd.f32 %v1151, %v1306
        %v1396 = vadd.f32 %v1152, %v1308
        %v1397 = vadd.f32 %v1153, %v1311
        %v1398 = vadd.f32 %v1154, %v1313
        %v1399 = vadd.f32 %v1155, %v1316
        %v1400 = vadd.f32 %v1156, %v1318
        %v1401 = vadd.f32 %v1157, %v1321
        %v1402 = vadd.f32 %v1158, %v1323
        %v1403 = vadd.f32 %v1159, %v1326
        %v1404 = vadd.f32 %v1160, %v1328
        %v1405 = vadd.f32 %v1161, %v1331
        %v1406 = vadd.f32 %v1162, %v1333
        %v1407 = vadd.f32 %v1163, %v1336
        %v1408 = vadd.f32 %v1164, %v1338
        %v1409 = vadd.f32 %v1165, %v1341
        %v1410 = vadd.f32 %v1166, %v1343
        %v1411 = vadd.f32 %v1167, %v1346
        %v1412 = vadd.f32 %v1168, %v1348
        %v1413 = vlaneseq
        %v1414 = vshrl.u32 %v1413, 7
        %v1415 = vsub.s32 0, %v1414
        %v1416 = vrot.slane %v298, %v1415
        %v1417 = vmul.f32 %v248, %v1416
        %v1418 = vmul.f32 %v249, %v1416
        %v1419 = vmul.f32 %v251, %v1416
        %v1420 = vmul.f32 %v252, %v1416
        %v1421 = vmul.f32 %v254, %v1416
        %v1422 = vmul.f32 %v255, %v1416
        %v1423 = vmul.f32 %v257, %v1416
        %v1424 = vmul.f32 %v258, %v1416
        %v1425 = vmul.f32 %v260, %v1416
        %v1426 = vmul.f32 %v261, %v1416
        %v1427 = vmul.f32 %v263, %v1416
        %v1428 = vmul.f32 %v264, %v1416
        %v1429 = vmul.f32 %v266, %v1416
        %v1430 = vmul.f32 %v267, %v1416
        %v1431 = vmul.f32 %v269, %v1416
        %v1432 = vmul.f32 %v270, %v1416
        %v1433 = vmul.f32 %v272, %v1416
        %v1434 = vmul.f32 %v273, %v1416
        %v1435 = vmul.f32 %v275, %v1416
        %v1436 = vmul.f32 %v276, %v1416
        %v1437 = vmul.f32 %v278, %v1416
        %v1438 = vmul.f32 %v279, %v1416
        %v1439 = vmul.f32 %v281, %v1416
        %v1440 = vmul.f32 %v282, %v1416
        %v1441 = vmul.f32 %v284, %v1416
        %v1442 = vmul.f32 %v285, %v1416
        %v1443 = vmul.f32 %v287, %v1416
        %v1444 = vmul.f32 %v288, %v1416
        %v1445 = vmul.f32 %v290, %v1416
        %v1446 = vmul.f32 %v291, %v1416
        %v1447 = vmul.f32 %v293, %v1416
        %v1448 = vmul.f32 %v294, %v1416
        %v1449 = vadd.f32 %v1381, %v1417
        %v1450 = vadd.f32 %v1382, %v1418
        %v1451 = vadd.f32 %v1383, %v1419
        %v1452 = vadd.f32 %v1384, %v1420
        %v1453 = vadd.f32 %v1385, %v1421
        %v1454 = vadd.f32 %v1386, %v1422
        %v1455 = vadd.f32 %v1387, %v1423
        %v1456 = vadd.f32 %v1388, %v1424
        %v1457 = vadd.f32 %v1389, %v1425
        %v1458 = vadd.f32 %v1390, %v1426
        %v1459 = vadd.f32 %v1391, %v1427
        %v1460 = vadd.f32 %v1392, %v1428
        %v1461 = vadd.f32 %v1393, %v1429
        %v1462 = vadd.f32 %v1394, %v1430
        %v1463 = vadd.f32 %v1395, %v1431
        %v1464 = vadd.f32 %v1396, %v1432
        %v1465 = vadd.f32 %v1397, %v1433
        %v1466 = vadd.f32 %v1398, %v1434
        %v1467 = vadd.f32 %v1399, %v1435
        %v1468 = vadd.f32 %v1400, %v1436
        %v1469 = vadd.f32 %v1401, %v1437
        %v1470 = vadd.f32 %v1402, %v1438
        %v1471 = vadd.f32 %v1403, %v1439
        %v1472 = vadd.f32 %v1404, %v1440
        %v1473 = vadd.f32 %v1405, %v1441
        %v1474 = vadd.f32 %v1406, %v1442
        %v1475 = vadd.f32 %v1407, %v1443
        %v1476 = vadd.f32 %v1408, %v1444
        %v1477 = vadd.f32 %v1409, %v1445
        %v1478 = vadd.f32 %v1410, %v1446
        %v1479 = vadd.f32 %v1411, %v1447
        %v1480 = vadd.f32 %v1412, %v1448
        %v1481 = vlaneseq
        %v1482 = vshrl.u32 %v1481, 7
        %v1483 = vsub.s32 1, %v1482
        %v1484 = vrot.slane %v298, %v1483
        %v1485 = vmul.f32 %v248, %v1484
        %v1486 = vmul.f32 %v249, %v1484
        %v1487 = vmul.f32 %v250, %v1484
        %v1488 = vmul.f32 %v251, %v1484
        %v1489 = vmul.f32 %v252, %v1484
        %v1490 = vmul.f32 %v253, %v1484
        %v1491 = vmul.f32 %v254, %v1484
        %v1492 = vmul.f32 %v255, %v1484
        %v1493 = vmul.f32 %v256, %v1484
        %v1494 = vmul.f32 %v257, %v1484
        %v1495 = vmul.f32 %v258, %v1484
        %v1496 = vmul.f32 %v259, %v1484
        %v1497 = vmul.f32 %v260, %v1484
        %v1498 = vmul.f32 %v261, %v1484
        %v1499 = vmul.f32 %v262, %v1484
        %v1500 = vmul.f32 %v263, %v1484
        %v1501 = vmul.f32 %v264, %v1484
        %v1502 = vmul.f32 %v265, %v1484
        %v1503 = vmul.f32 %v266, %v1484
        %v1504 = vmul.f32 %v267, %v1484
        %v1505 = vmul.f32 %v268, %v1484
        %v1506 = vmul.f32 %v269, %v1484
        %v1507 = vmul.f32 %v270, %v1484
        %v1508 = vmul.f32 %v271, %v1484
        %v1509 = vmul.f32 %v272, %v1484
        %v1510 = vmul.f32 %v273, %v1484
        %v1511 = vmul.f32 %v274, %v1484
        %v1512 = vmul.f32 %v275, %v1484
        %v1513 = vmul.f32 %v276, %v1484
        %v1514 = vmul.f32 %v277, %v1484
        %v1515 = vmul.f32 %v278, %v1484
        %v1516 = vmul.f32 %v279, %v1484
        %v1517 = vmul.f32 %v280, %v1484
        %v1518 = vmul.f32 %v281, %v1484
        %v1519 = vmul.f32 %v282, %v1484
        %v1520 = vmul.f32 %v283, %v1484
        %v1521 = vmul.f32 %v284, %v1484
        %v1522 = vmul.f32 %v285, %v1484
        %v1523 = vmul.f32 %v286, %v1484
        %v1524 = vmul.f32 %v287, %v1484
        %v1525 = vmul.f32 %v288, %v1484
        %v1526 = vmul.f32 %v289, %v1484
        %v1527 = vmul.f32 %v290, %v1484
        %v1528 = vmul.f32 %v291, %v1484
        %v1529 = vmul.f32 %v292, %v1484
        %v1530 = vmul.f32 %v293, %v1484
        %v1531 = vmul.f32 %v294, %v1484
        %v1532 = vmul.f32 %v295, %v1484
        %v1581 = vrot.slane %v1485, 1
        %v1582 = vrot.slane %v1486, 1
        %v1583 = vsel %vm467, %v1581, %v1582
        %v1584 = vrot.slane %v1487, 1
        %v1585 = vsel %vm467, %v1582, %v1584
        %v1586 = vrot.slane %v1488, 1
        %v1587 = vrot.slane %v1489, 1
        %v1588 = vsel %vm467, %v1586, %v1587
        %v1589 = vrot.slane %v1490, 1
        %v1590 = vsel %vm467, %v1587, %v1589
        %v1591 = vrot.slane %v1491, 1
        %v1592 = vrot.slane %v1492, 1
        %v1593 = vsel %vm467, %v1591, %v1592
        %v1594 = vrot.slane %v1493, 1
        %v1595 = vsel %vm467, %v1592, %v1594
        %v1596 = vrot.slane %v1494, 1
        %v1597 = vrot.slane %v1495, 1
        %v1598 = vsel %vm467, %v1596, %v1597
        %v1599 = vrot.slane %v1496, 1
        %v1600 = vsel %vm467, %v1597, %v1599
        %v1601 = vrot.slane %v1497, 1
        %v1602 = vrot.slane %v1498, 1
        %v1603 = vsel %vm467, %v1601, %v1602
        %v1604 = vrot.slane %v1499, 1
        %v1605 = vsel %vm467, %v1602, %v1604
        %v1606 = vrot.slane %v1500, 1
        %v1607 = vrot.slane %v1501, 1
        %v1608 = vsel %vm467, %v1606, %v1607
        %v1609 = vrot.slane %v1502, 1
        %v1610 = vsel %vm467, %v1607, %v1609
        %v1611 = vrot.slane %v1503, 1
        %v1612 = vrot.slane %v1504, 1
        %v1613 = vsel %vm467, %v1611, %v1612
        %v1614 = vrot.slane %v1505, 1
        %v1615 = vsel %vm467, %v1612, %v1614
        %v1616 = vrot.slane %v1506, 1
        %v1617 = vrot.slane %v1507, 1
        %v1618 = vsel %vm467, %v1616, %v1617
        %v1619 = vrot.slane %v1508, 1
        %v1620 = vsel %vm467, %v1617, %v1619
        %v1621 = vrot.slane %v1509, 1
        %v1622 = vrot.slane %v1510, 1
        %v1623 = vsel %vm467, %v1621, %v1622
        %v1624 = vrot.slane %v1511, 1
        %v1625 = vsel %vm467, %v1622, %v1624
        %v1626 = vrot.slane %v1512, 1
        %v1627 = vrot.slane %v1513, 1
        %v1628 = vsel %vm467, %v1626, %v1627
        %v1629 = vrot.slane %v1514, 1
        %v1630 = vsel %vm467, %v1627, %v1629
        %v1631 = vrot.slane %v1515, 1
        %v1632 = vrot.slane %v1516, 1
        %v1633 = vsel %vm467, %v1631, %v1632
        %v1634 = vrot.slane %v1517, 1
        %v1635 = vsel %vm467, %v1632, %v1634
        %v1636 = vrot.slane %v1518, 1
        %v1637 = vrot.slane %v1519, 1
        %v1638 = vsel %vm467, %v1636, %v1637
        %v1639 = vrot.slane %v1520, 1
        %v1640 = vsel %vm467, %v1637, %v1639
        %v1641 = vrot.slane %v1521, 1
        %v1642 = vrot.slane %v1522, 1
        %v1643 = vsel %vm467, %v1641, %v1642
        %v1644 = vrot.slane %v1523, 1
        %v1645 = vsel %vm467, %v1642, %v1644
        %v1646 = vrot.slane %v1524, 1
        %v1647 = vrot.slane %v1525, 1
        %v1648 = vsel %vm467, %v1646, %v1647
        %v1649 = vrot.slane %v1526, 1
        %v1650 = vsel %vm467, %v1647, %v1649
        %v1651 = vrot.slane %v1527, 1
        %v1652 = vrot.slane %v1528, 1
        %v1653 = vsel %vm467, %v1651, %v1652
        %v1654 = vrot.slane %v1529, 1
        %v1655 = vsel %vm467, %v1652, %v1654
        %v1656 = vrot.slane %v1530, 1
        %v1657 = vrot.slane %v1531, 1
        %v1658 = vsel %vm467, %v1656, %v1657
        %v1659 = vrot.slane %v1532, 1
        %v1660 = vsel %vm467, %v1657, %v1659
        %v1693 = vadd.f32 %v1449, %v1583
        %v1694 = vadd.f32 %v1450, %v1585
        %v1695 = vadd.f32 %v1451, %v1588
        %v1696 = vadd.f32 %v1452, %v1590
        %v1697 = vadd.f32 %v1453, %v1593
        %v1698 = vadd.f32 %v1454, %v1595
        %v1699 = vadd.f32 %v1455, %v1598
        %v1700 = vadd.f32 %v1456, %v1600
        %v1701 = vadd.f32 %v1457, %v1603
        %v1702 = vadd.f32 %v1458, %v1605
        %v1703 = vadd.f32 %v1459, %v1608
        %v1704 = vadd.f32 %v1460, %v1610
        %v1705 = vadd.f32 %v1461, %v1613
        %v1706 = vadd.f32 %v1462, %v1615
        %v1707 = vadd.f32 %v1463, %v1618
        %v1708 = vadd.f32 %v1464, %v1620
        %v1709 = vadd.f32 %v1465, %v1623
        %v1710 = vadd.f32 %v1466, %v1625
        %v1711 = vadd.f32 %v1467, %v1628
        %v1712 = vadd.f32 %v1468, %v1630
        %v1713 = vadd.f32 %v1469, %v1633
        %v1714 = vadd.f32 %v1470, %v1635
        %v1715 = vadd.f32 %v1471, %v1638
        %v1716 = vadd.f32 %v1472, %v1640
        %v1717 = vadd.f32 %v1473, %v1643
        %v1718 = vadd.f32 %v1474, %v1645
        %v1719 = vadd.f32 %v1475, %v1648
        %v1720 = vadd.f32 %v1476, %v1650
        %v1721 = vadd.f32 %v1477, %v1653
        %v1722 = vadd.f32 %v1478, %v1655
        %v1723 = vadd.f32 %v1479, %v1658
        %v1724 = vadd.f32 %v1480, %v1660
        %v1725 = vlaneseq
        %v1726 = vshrl.u32 %v1725, 7
        %v1727 = vsub.s32 2, %v1726
        %v1728 = vrot.slane %v298, %v1727
        %v1729 = vmul.f32 %v248, %v1728
        %v1730 = vmul.f32 %v249, %v1728
        %v1731 = vmul.f32 %v250, %v1728
        %v1732 = vmul.f32 %v251, %v1728
        %v1733 = vmul.f32 %v252, %v1728
        %v1734 = vmul.f32 %v253, %v1728
        %v1735 = vmul.f32 %v254, %v1728
        %v1736 = vmul.f32 %v255, %v1728
        %v1737 = vmul.f32 %v256, %v1728
        %v1738 = vmul.f32 %v257, %v1728
        %v1739 = vmul.f32 %v258, %v1728
        %v1740 = vmul.f32 %v259, %v1728
        %v1741 = vmul.f32 %v260, %v1728
        %v1742 = vmul.f32 %v261, %v1728
        %v1743 = vmul.f32 %v262, %v1728
        %v1744 = vmul.f32 %v263, %v1728
        %v1745 = vmul.f32 %v264, %v1728
        %v1746 = vmul.f32 %v265, %v1728
        %v1747 = vmul.f32 %v266, %v1728
        %v1748 = vmul.f32 %v267, %v1728
        %v1749 = vmul.f32 %v268, %v1728
        %v1750 = vmul.f32 %v269, %v1728
        %v1751 = vmul.f32 %v270, %v1728
        %v1752 = vmul.f32 %v271, %v1728
        %v1753 = vmul.f32 %v272, %v1728
        %v1754 = vmul.f32 %v273, %v1728
        %v1755 = vmul.f32 %v274, %v1728
        %v1756 = vmul.f32 %v275, %v1728
        %v1757 = vmul.f32 %v276, %v1728
        %v1758 = vmul.f32 %v277, %v1728
        %v1759 = vmul.f32 %v278, %v1728
        %v1760 = vmul.f32 %v279, %v1728
        %v1761 = vmul.f32 %v280, %v1728
        %v1762 = vmul.f32 %v281, %v1728
        %v1763 = vmul.f32 %v282, %v1728
        %v1764 = vmul.f32 %v283, %v1728
        %v1765 = vmul.f32 %v284, %v1728
        %v1766 = vmul.f32 %v285, %v1728
        %v1767 = vmul.f32 %v286, %v1728
        %v1768 = vmul.f32 %v287, %v1728
        %v1769 = vmul.f32 %v288, %v1728
        %v1770 = vmul.f32 %v289, %v1728
        %v1771 = vmul.f32 %v290, %v1728
        %v1772 = vmul.f32 %v291, %v1728
        %v1773 = vmul.f32 %v292, %v1728
        %v1774 = vmul.f32 %v293, %v1728
        %v1775 = vmul.f32 %v294, %v1728
        %v1776 = vmul.f32 %v295, %v1728
        %v1825 = vrot.slane %v1729, 2
        %v1826 = vrot.slane %v1730, 2
        %v1827 = vsel %vm712, %v1825, %v1826
        %v1828 = vrot.slane %v1731, 2
        %v1829 = vsel %vm712, %v1826, %v1828
        %v1830 = vrot.slane %v1732, 2
        %v1831 = vrot.slane %v1733, 2
        %v1832 = vsel %vm712, %v1830, %v1831
        %v1833 = vrot.slane %v1734, 2
        %v1834 = vsel %vm712, %v1831, %v1833
        %v1835 = vrot.slane %v1735, 2
        %v1836 = vrot.slane %v1736, 2
        %v1837 = vsel %vm712, %v1835, %v1836
        %v1838 = vrot.slane %v1737, 2
        %v1839 = vsel %vm712, %v1836, %v1838
        %v1840 = vrot.slane %v1738, 2
        %v1841 = vrot.slane %v1739, 2
        %v1842 = vsel %vm712, %v1840, %v1841
        %v1843 = vrot.slane %v1740, 2
        %v1844 = vsel %vm712, %v1841, %v1843
        %v1845 = vrot.slane %v1741, 2
        %v1846 = vrot.slane %v1742, 2
        %v1847 = vsel %vm712, %v1845, %v1846
        %v1848 = vrot.slane %v1743, 2
        %v1849 = vsel %vm712, %v1846, %v1848
        %v1850 = vrot.slane %v1744, 2
        %v1851 = vrot.slane %v1745, 2
        %v1852 = vsel %vm712, %v1850, %v1851
        %v1853 = vrot.slane %v1746, 2
        %v1854 = vsel %vm712, %v1851, %v1853
        %v1855 = vrot.slane %v1747, 2
        %v1856 = vrot.slane %v1748, 2
        %v1857 = vsel %vm712, %v1855, %v1856
        %v1858 = vrot.slane %v1749, 2
        %v1859 = vsel %vm712, %v1856, %v1858
        %v1860 = vrot.slane %v1750, 2
        %v1861 = vrot.slane %v1751, 2
        %v1862 = vsel %vm712, %v1860, %v1861
        %v1863 = vrot.slane %v1752, 2
        %v1864 = vsel %vm712, %v1861, %v1863
        %v1865 = vrot.slane %v1753, 2
        %v1866 = vrot.slane %v1754, 2
        %v1867 = vsel %vm712, %v1865, %v1866
        %v1868 = vrot.slane %v1755, 2
        %v1869 = vsel %vm712, %v1866, %v1868
        %v1870 = vrot.slane %v1756, 2
        %v1871 = vrot.slane %v1757, 2
        %v1872 = vsel %vm712, %v1870, %v1871
        %v1873 = vrot.slane %v1758, 2
        %v1874 = vsel %vm712, %v1871, %v1873
        %v1875 = vrot.slane %v1759, 2
        %v1876 = vrot.slane %v1760, 2
        %v1877 = vsel %vm712, %v1875, %v1876
        %v1878 = vrot.slane %v1761, 2
        %v1879 = vsel %vm712, %v1876, %v1878
        %v1880 = vrot.slane %v1762, 2
        %v1881 = vrot.slane %v1763, 2
        %v1882 = vsel %vm712, %v1880, %v1881
        %v1883 = vrot.slane %v1764, 2
        %v1884 = vsel %vm712, %v1881, %v1883
        %v1885 = vrot.slane %v1765, 2
        %v1886 = vrot.slane %v1766, 2
        %v1887 = vsel %vm712, %v1885, %v1886
        %v1888 = vrot.slane %v1767, 2
        %v1889 = vsel %vm712, %v1886, %v1888
        %v1890 = vrot.slane %v1768, 2
        %v1891 = vrot.slane %v1769, 2
        %v1892 = vsel %vm712, %v1890, %v1891
        %v1893 = vrot.slane %v1770, 2
        %v1894 = vsel %vm712, %v1891, %v1893
        %v1895 = vrot.slane %v1771, 2
        %v1896 = vrot.slane %v1772, 2
        %v1897 = vsel %vm712, %v1895, %v1896
        %v1898 = vrot.slane %v1773, 2
        %v1899 = vsel %vm712, %v1896, %v1898
        %v1900 = vrot.slane %v1774, 2
        %v1901 = vrot.slane %v1775, 2
        %v1902 = vsel %vm712, %v1900, %v1901
        %v1903 = vrot.slane %v1776, 2
        %v1904 = vsel %vm712, %v1901, %v1903
        %v1937 = vadd.f32 %v1693, %v1827
        %v1938 = vadd.f32 %v1694, %v1829
        %v1939 = vadd.f32 %v1695, %v1832
        %v1940 = vadd.f32 %v1696, %v1834
        %v1941 = vadd.f32 %v1697, %v1837
        %v1942 = vadd.f32 %v1698, %v1839
        %v1943 = vadd.f32 %v1699, %v1842
        %v1944 = vadd.f32 %v1700, %v1844
        %v1945 = vadd.f32 %v1701, %v1847
        %v1946 = vadd.f32 %v1702, %v1849
        %v1947 = vadd.f32 %v1703, %v1852
        %v1948 = vadd.f32 %v1704, %v1854
        %v1949 = vadd.f32 %v1705, %v1857
        %v1950 = vadd.f32 %v1706, %v1859
        %v1951 = vadd.f32 %v1707, %v1862
        %v1952 = vadd.f32 %v1708, %v1864
        %v1953 = vadd.f32 %v1709, %v1867
        %v1954 = vadd.f32 %v1710, %v1869
        %v1955 = vadd.f32 %v1711, %v1872
        %v1956 = vadd.f32 %v1712, %v1874
        %v1957 = vadd.f32 %v1713, %v1877
        %v1958 = vadd.f32 %v1714, %v1879
        %v1959 = vadd.f32 %v1715, %v1882
        %v1960 = vadd.f32 %v1716, %v1884
        %v1961 = vadd.f32 %v1717, %v1887
        %v1962 = vadd.f32 %v1718, %v1889
        %v1963 = vadd.f32 %v1719, %v1892
        %v1964 = vadd.f32 %v1720, %v1894
        %v1965 = vadd.f32 %v1721, %v1897
        %v1966 = vadd.f32 %v1722, %v1899
        %v1967 = vadd.f32 %v1723, %v1902
        %v1968 = vadd.f32 %v1724, %v1904
        %v1969 = vld [vmem:[%s2] sm:$0x1]
        %v1971 = vlaneseq
        %v1972 = vshrl.u32 %v1971, 7
        %v1973 = vsub.s32 0, %v1972
        %v1974 = vrot.slane %v1969, %v1973
        %v1976 = vadd.f32 %v1937, %v1974
        %v1977 = vadd.f32 %v1938, %v1974
        %v1978 = vadd.f32 %v1939, %v1974
        %v1979 = vadd.f32 %v1940, %v1974
        %v1980 = vadd.f32 %v1941, %v1974
        %v1981 = vadd.f32 %v1942, %v1974
        %v1982 = vadd.f32 %v1943, %v1974
        %v1983 = vadd.f32 %v1944, %v1974
        %v1984 = vadd.f32 %v1945, %v1974
        %v1985 = vadd.f32 %v1946, %v1974
        %v1986 = vadd.f32 %v1947, %v1974
        %v1987 = vadd.f32 %v1948, %v1974
        %v1988 = vadd.f32 %v1949, %v1974
        %v1989 = vadd.f32 %v1950, %v1974
        %v1990 = vadd.f32 %v1951, %v1974
        %v1991 = vadd.f32 %v1952, %v1974
        %v1992 = vadd.f32 %v1953, %v1974
        %v1993 = vadd.f32 %v1954, %v1974
        %v1994 = vadd.f32 %v1955, %v1974
        %v1995 = vadd.f32 %v1956, %v1974
        %v1996 = vadd.f32 %v1957, %v1974
        %v1997 = vadd.f32 %v1958, %v1974
        %v1998 = vadd.f32 %v1959, %v1974
        %v1999 = vadd.f32 %v1960, %v1974
        %v2000 = vadd.f32 %v1961, %v1974
        %v2001 = vadd.f32 %v1962, %v1974
        %v2002 = vadd.f32 %v1963, %v1974
        %v2003 = vadd.f32 %v1964, %v1974
        %v2004 = vadd.f32 %v1965, %v1974
        %v2005 = vadd.f32 %v1966, %v1974
        %v2006 = vadd.f32 %v1967, %v1974
        %v2007 = vadd.f32 %v1968, %v1974
        %v2008 = vmax.f32 %v1976, 0.0
        %v2009 = vmax.f32 %v1977, 0.0
        %v2010 = vmax.f32 %v1978, 0.0
        %v2011 = vmax.f32 %v1979, 0.0
        %v2012 = vmax.f32 %v1980, 0.0
        %v2013 = vmax.f32 %v1981, 0.0
        %v2014 = vmax.f32 %v1982, 0.0
        %v2015 = vmax.f32 %v1983, 0.0
        %v2016 = vmax.f32 %v1984, 0.0
        %v2017 = vmax.f32 %v1985, 0.0
        %v2018 = vmax.f32 %v1986, 0.0
        %v2019 = vmax.f32 %v1987, 0.0
        %v2020 = vmax.f32 %v1988, 0.0
        %v2021 = vmax.f32 %v1989, 0.0
        %v2022 = vmax.f32 %v1990, 0.0
        %v2023 = vmax.f32 %v1991, 0.0
        %v2024 = vmax.f32 %v1992, 0.0
        %v2025 = vmax.f32 %v1993, 0.0
        %v2026 = vmax.f32 %v1994, 0.0
        %v2027 = vmax.f32 %v1995, 0.0
        %v2028 = vmax.f32 %v1996, 0.0
        %v2029 = vmax.f32 %v1997, 0.0
        %v2030 = vmax.f32 %v1998, 0.0
        %v2031 = vmax.f32 %v1999, 0.0
        %v2032 = vmax.f32 %v2000, 0.0
        %v2033 = vmax.f32 %v2001, 0.0
        %v2034 = vmax.f32 %v2002, 0.0
        %v2035 = vmax.f32 %v2003, 0.0
        %v2036 = vmax.f32 %v2004, 0.0
        %v2037 = vmax.f32 %v2005, 0.0
        %v2038 = vmax.f32 %v2006, 0.0
        %v2039 = vmax.f32 %v2007, 0.0
        %v2040 = vpack.c.bf16 %v2009, %v2008
        %v2041 = vpack.c.bf16 %v2011, %v2010
        %v2042 = vpack.c.bf16 %v2013, %v2012
        %v2043 = vpack.c.bf16 %v2015, %v2014
        %v2044 = vpack.c.bf16 %v2017, %v2016
        %v2045 = vpack.c.bf16 %v2019, %v2018
        %v2046 = vpack.c.bf16 %v2021, %v2020
        %v2047 = vpack.c.bf16 %v2023, %v2022
        %v2048 = vpack.c.bf16 %v2025, %v2024
        %v2049 = vpack.c.bf16 %v2027, %v2026
        %v2050 = vpack.c.bf16 %v2029, %v2028
        %v2051 = vpack.c.bf16 %v2031, %v2030
        %v2052 = vpack.c.bf16 %v2033, %v2032
        %v2053 = vpack.c.bf16 %v2035, %v2034
        %v2054 = vpack.c.bf16 %v2037, %v2036
        %v2055 = vpack.c.bf16 %v2039, %v2038
        %v2056 = vld [vmem:[%s3] sm:$0xf]
        %v2057 = vld [vmem:[%s3 + $0x4] sm:$0xf]
        %v2058 = vld [vmem:[%s3 + $0x8] sm:$0xf]
        %v2059 = vld [vmem:[%s3 + $0xc] sm:$0xf]
        %v2060 = vld [vmem:[%s3 + $0x10] sm:$0xf]
        %v2061 = vld [vmem:[%s3 + $0x14] sm:$0xf]
        %v2062 = vld [vmem:[%s3 + $0x18] sm:$0xf]
        %v2063 = vld [vmem:[%s3 + $0x1c] sm:$0xf]
        %v2064 = vld [vmem:[%s3 + $0x20] sm:$0xf]
        %v2065 = vld [vmem:[%s3 + $0x24] sm:$0xf]
        %v2066 = vld [vmem:[%s3 + $0x28] sm:$0xf]
        %v2067 = vld [vmem:[%s3 + $0x2c] sm:$0xf]
        %v2068 = vld [vmem:[%s3 + $0x30] sm:$0xf]
        %v2069 = vld [vmem:[%s3 + $0x34] sm:$0xf]
        %v2070 = vld [vmem:[%s3 + $0x38] sm:$0xf]
        %v2071 = vld [vmem:[%s3 + $0x3c] sm:$0xf]
        %v2072 = vld [vmem:[%s4] sm:$0x1]
        %v2074 = vlaneseq
        %v2075 = vshrl.u32 %v2074, 7
        %v2076 = vsub.s32 0, %v2075
        %v2077 = vrot.slane %v2072, %v2076
        %v2095 = vunpack.c.l.b16 %v2056
        %v2096 = vunpack.c.l.b16 %v2057
        %v2097 = vunpack.c.l.b16 %v2058
        %v2098 = vunpack.c.l.b16 %v2059
        %v2099 = vunpack.c.l.b16 %v2060
        %v2100 = vunpack.c.l.b16 %v2061
        %v2101 = vunpack.c.l.b16 %v2062
        %v2102 = vunpack.c.l.b16 %v2063
        %v2103 = vunpack.c.l.b16 %v2064
        %v2104 = vunpack.c.l.b16 %v2065
        %v2105 = vunpack.c.l.b16 %v2066
        %v2106 = vunpack.c.l.b16 %v2067
        %v2107 = vunpack.c.l.b16 %v2068
        %v2108 = vunpack.c.l.b16 %v2069
        %v2109 = vunpack.c.l.b16 %v2070
        %v2110 = vunpack.c.l.b16 %v2071
        %v2111 = vpack.c.b16 %v2096, %v2095
        %v2112 = vpack.c.b16 %v2098, %v2097
        %v2113 = vpack.c.b16 %v2100, %v2099
        %v2114 = vpack.c.b16 %v2102, %v2101
        %v2115 = vpack.c.b16 %v2104, %v2103
        %v2116 = vpack.c.b16 %v2106, %v2105
        %v2117 = vpack.c.b16 %v2108, %v2107
        %v2118 = vpack.c.b16 %v2110, %v2109
        %2127 = vmatprep.subr.bf16.mxu0 0
        %2128 = vmatpush1.bf16.msra.mxu0 %v2111
        %2129 = vmatprep.subr.bf16.mxu0 0
        %2130 = vmatpush1.bf16.msra.mxu0 %v2112
        %2131 = vmatprep.subr.bf16.mxu0 0
        %2132 = vmatpush1.bf16.msra.mxu0 %v2113
        %2133 = vmatprep.subr.bf16.mxu0 0
        %2134 = vmatpush1.bf16.msra.mxu0 %v2114
        %2135 = vmatprep.subr.bf16.mxu0 0
        %2136 = vmatpush1.bf16.msra.mxu0 %v2115
        %2137 = vmatprep.subr.bf16.mxu0 0
        %2138 = vmatpush1.bf16.msra.mxu0 %v2116
        %2139 = vmatprep.subr.bf16.mxu0 0
        %2140 = vmatpush1.bf16.msra.mxu0 %v2117
        %2141 = vmatprep.subr.bf16.mxu0 0
        %2142 = vmatpush1.bf16.msra.mxu0 %v2118
        %2143 = vmatprep.subr.bf16.mxu0 0
        %2144 = vmatpush1.bf16.msra.mxu0 0
        %2145 = vmatprep.subr.bf16.mxu0 0
        %2146 = vmatpush1.bf16.msra.mxu0 0
        %2147 = vmatprep.subr.bf16.mxu0 0
        %2148 = vmatpush1.bf16.msra.mxu0 0
        %2149 = vmatprep.subr.bf16.mxu0 0
        %2150 = vmatpush1.bf16.msra.mxu0 0
        %2151 = vmatprep.subr.bf16.mxu0 0
        %2152 = vmatpush1.bf16.msra.mxu0 0
        %2153 = vmatprep.subr.bf16.mxu0 0
        %2154 = vmatpush1.bf16.msra.mxu0 0
        %2155 = vmatprep.subr.bf16.mxu0 0
        %2156 = vmatpush1.bf16.msra.mxu0 0
        %2157 = vmatprep.subr.bf16.mxu0 0
        %2158 = vmatpush1.bf16.msra.mxu0 0
        %2159 = vmatprep.mubr.bf16.mxu0 0
        %2160 = vmatmul.mubr.bf16.gmra.mrb[0].mxu0 %v2040
        %v2161 = vpop.f32.mrb[0].mxu0
        %v2162 = vadd.f32 %v2077, %v2161
        %v2163 = vpop.f32.mrb[0].mxu0
        %v2164 = vpop.f32.mrb[0].mxu0
        %v2165 = vadd.f32 %v2077, %v2164
        %v2166 = vpop.f32.mrb[0].mxu0
        %2167 = vmatprep.mubr.bf16.mxu0 0
        %2168 = vmatmul.mubr.bf16.gmra.mrb[0].mxu0 %v2041
        %v2169 = vpop.f32.mrb[0].mxu0
        %v2170 = vadd.f32 %v2077, %v2169
        %v2171 = vpop.f32.mrb[0].mxu0
        %v2172 = vpop.f32.mrb[0].mxu0
        %v2173 = vadd.f32 %v2077, %v2172
        %v2174 = vpop.f32.mrb[0].mxu0
        %2175 = vmatprep.mubr.bf16.mxu0 0
        %2176 = vmatmul.mubr.bf16.gmra.mrb[0].mxu0 %v2042
        %v2177 = vpop.f32.mrb[0].mxu0
        %v2178 = vadd.f32 %v2077, %v2177
        %v2179 = vpop.f32.mrb[0].mxu0
        %v2180 = vpop.f32.mrb[0].mxu0
        %v2181 = vadd.f32 %v2077, %v2180
        %v2182 = vpop.f32.mrb[0].mxu0
        %2183 = vmatprep.mubr.bf16.mxu0 0
        %2184 = vmatmul.mubr.bf16.gmra.mrb[0].mxu0 %v2043
        %v2185 = vpop.f32.mrb[0].mxu0
        %v2186 = vadd.f32 %v2077, %v2185
        %v2187 = vpop.f32.mrb[0].mxu0
        %v2188 = vpop.f32.mrb[0].mxu0
        %v2189 = vadd.f32 %v2077, %v2188
        %v2190 = vpop.f32.mrb[0].mxu0
        %2191 = vmatprep.mubr.bf16.mxu0 0
        %2192 = vmatmul.mubr.bf16.gmra.mrb[0].mxu0 %v2044
        %v2193 = vpop.f32.mrb[0].mxu0
        %v2194 = vadd.f32 %v2077, %v2193
        %v2195 = vpop.f32.mrb[0].mxu0
        %v2196 = vpop.f32.mrb[0].mxu0
        %v2197 = vadd.f32 %v2077, %v2196
        %v2198 = vpop.f32.mrb[0].mxu0
        %2199 = vmatprep.mubr.bf16.mxu0 0
        %2200 = vmatmul.mubr.bf16.gmra.mrb[0].mxu0 %v2045
        %v2201 = vpop.f32.mrb[0].mxu0
        %v2202 = vadd.f32 %v2077, %v2201
        %v2203 = vpop.f32.mrb[0].mxu0
        %v2204 = vpop.f32.mrb[0].mxu0
        %v2205 = vadd.f32 %v2077, %v2204
        %v2206 = vpop.f32.mrb[0].mxu0
        %2207 = vmatprep.mubr.bf16.mxu0 0
        %2208 = vmatmul.mubr.bf16.gmra.mrb[0].mxu0 %v2046
        %v2209 = vpop.f32.mrb[0].mxu0
        %v2210 = vadd.f32 %v2077, %v2209
        %v2211 = vpop.f32.mrb[0].mxu0
        %v2212 = vpop.f32.mrb[0].mxu0
        %v2213 = vadd.f32 %v2077, %v2212
        %v2214 = vpop.f32.mrb[0].mxu0
        %2215 = vmatprep.mubr.bf16.mxu0 0
        %2216 = vmatmul.mubr.bf16.gmra.mrb[0].mxu0 %v2047
        %v2217 = vpop.f32.mrb[0].mxu0
        %v2218 = vadd.f32 %v2077, %v2217
        %v2219 = vpop.f32.mrb[0].mxu0
        %v2220 = vpop.f32.mrb[0].mxu0
        %v2221 = vadd.f32 %v2077, %v2220
        %v2222 = vpop.f32.mrb[0].mxu0
        %2223 = vmatprep.mubr.bf16.mxu0 0
        %2224 = vmatmul.mubr.bf16.gmra.mrb[0].mxu0 %v2048
        %v2225 = vpop.f32.mrb[0].mxu0
        %v2226 = vadd.f32 %v2077, %v2225
        %v2227 = vpop.f32.mrb[0].mxu0
        %v2228 = vpop.f32.mrb[0].mxu0
        %v2229 = vadd.f32 %v2077, %v2228
        %v2230 = vpop.f32.mrb[0].mxu0
        %2231 = vmatprep.mubr.bf16.mxu0 0
        %2232 = vmatmul.mubr.bf16.gmra.mrb[0].mxu0 %v2049
        %v2233 = vpop.f32.mrb[0].mxu0
        %v2234 = vadd.f32 %v2077, %v2233
        %v2235 = vpop.f32.mrb[0].mxu0
        %v2236 = vpop.f32.mrb[0].mxu0
        %v2237 = vadd.f32 %v2077, %v2236
        %v2238 = vpop.f32.mrb[0].mxu0
        %2239 = vmatprep.mubr.bf16.mxu0 0
        %2240 = vmatmul.mubr.bf16.gmra.mrb[0].mxu0 %v2050
        %v2241 = vpop.f32.mrb[0].mxu0
        %v2242 = vadd.f32 %v2077, %v2241
        %v2243 = vpop.f32.mrb[0].mxu0
        %v2244 = vpop.f32.mrb[0].mxu0
        %v2245 = vadd.f32 %v2077, %v2244
        %v2246 = vpop.f32.mrb[0].mxu0
        %2247 = vmatprep.mubr.bf16.mxu0 0
        %2248 = vmatmul.mubr.bf16.gmra.mrb[0].mxu0 %v2051
        %v2249 = vpop.f32.mrb[0].mxu0
        %v2250 = vadd.f32 %v2077, %v2249
        %v2251 = vpop.f32.mrb[0].mxu0
        %v2252 = vpop.f32.mrb[0].mxu0
        %v2253 = vadd.f32 %v2077, %v2252
        %v2254 = vpop.f32.mrb[0].mxu0
        %2255 = vmatprep.mubr.bf16.mxu0 0
        %2256 = vmatmul.mubr.bf16.gmra.mrb[0].mxu0 %v2052
        %v2257 = vpop.f32.mrb[0].mxu0
        %v2258 = vadd.f32 %v2077, %v2257
        %v2259 = vpop.f32.mrb[0].mxu0
        %v2260 = vpop.f32.mrb[0].mxu0
        %v2261 = vadd.f32 %v2077, %v2260
        %v2262 = vpop.f32.mrb[0].mxu0
        %2263 = vmatprep.mubr.bf16.mxu0 0
        %2264 = vmatmul.mubr.bf16.gmra.mrb[0].mxu0 %v2053
        %v2265 = vpop.f32.mrb[0].mxu0
        %v2266 = vadd.f32 %v2077, %v2265
        %v2267 = vpop.f32.mrb[0].mxu0
        %v2268 = vpop.f32.mrb[0].mxu0
        %v2269 = vadd.f32 %v2077, %v2268
        %v2270 = vpop.f32.mrb[0].mxu0
        %2271 = vmatprep.mubr.bf16.mxu0 0
        %2272 = vmatmul.mubr.bf16.gmra.mrb[0].mxu0 %v2054
        %v2273 = vpop.f32.mrb[0].mxu0
        %v2274 = vadd.f32 %v2077, %v2273
        %v2275 = vpop.f32.mrb[0].mxu0
        %v2276 = vpop.f32.mrb[0].mxu0
        %v2277 = vadd.f32 %v2077, %v2276
        %v2278 = vpop.f32.mrb[0].mxu0
        %2279 = vmatprep.mubr.bf16.mxu0 0
        %2280 = vmatmul.mubr.bf16.gmra.mrb[0].mxu0 %v2055
        %v2281 = vpop.f32.mrb[0].mxu0
        %v2282 = vadd.f32 %v2077, %v2281
        %v2283 = vpop.f32.mrb[0].mxu0
        %v2284 = vpop.f32.mrb[0].mxu0
        %v2285 = vadd.f32 %v2077, %v2284
        %v2286 = vpop.f32.mrb[0].mxu0
        %2287 = vdwg.mxu0
        %v2288 = vmax.f32 %v2162, 0.0
        %v2289 = vmax.f32 %v2165, 0.0
        %v2290 = vmax.f32 %v2170, 0.0
        %v2291 = vmax.f32 %v2173, 0.0
        %v2292 = vmax.f32 %v2178, 0.0
        %v2293 = vmax.f32 %v2181, 0.0
        %v2294 = vmax.f32 %v2186, 0.0
        %v2295 = vmax.f32 %v2189, 0.0
        %v2296 = vmax.f32 %v2194, 0.0
        %v2297 = vmax.f32 %v2197, 0.0
        %v2298 = vmax.f32 %v2202, 0.0
        %v2299 = vmax.f32 %v2205, 0.0
        %v2300 = vmax.f32 %v2210, 0.0
        %v2301 = vmax.f32 %v2213, 0.0
        %v2302 = vmax.f32 %v2218, 0.0
        %v2303 = vmax.f32 %v2221, 0.0
        %v2304 = vmax.f32 %v2226, 0.0
        %v2305 = vmax.f32 %v2229, 0.0
        %v2306 = vmax.f32 %v2234, 0.0
        %v2307 = vmax.f32 %v2237, 0.0
        %v2308 = vmax.f32 %v2242, 0.0
        %v2309 = vmax.f32 %v2245, 0.0
        %v2310 = vmax.f32 %v2250, 0.0
        %v2311 = vmax.f32 %v2253, 0.0
        %v2312 = vmax.f32 %v2258, 0.0
        %v2313 = vmax.f32 %v2261, 0.0
        %v2314 = vmax.f32 %v2266, 0.0
        %v2315 = vmax.f32 %v2269, 0.0
        %v2316 = vmax.f32 %v2274, 0.0
        %v2317 = vmax.f32 %v2277, 0.0
        %v2318 = vmax.f32 %v2282, 0.0
        %v2319 = vmax.f32 %v2285, 0.0
        %2320 = vst [vmem:[%s231] sm:$0xff] %v2288
        %2321 = vst [vmem:[%s231 + $0x8] sm:$0xff] %v2289
        %2322 = vst [vmem:[%s231 + $0x10] sm:$0xff] %v2290
        %2323 = vst [vmem:[%s231 + $0x18] sm:$0xff] %v2291
        %2324 = vst [vmem:[%s231 + $0x20] sm:$0xff] %v2292
        %2325 = vst [vmem:[%s231 + $0x28] sm:$0xff] %v2293
        %2326 = vst [vmem:[%s231 + $0x30] sm:$0xff] %v2294
        %2327 = vst [vmem:[%s231 + $0x38] sm:$0xff] %v2295
        %2328 = vst [vmem:[%s231 + $0x40] sm:$0xff] %v2296
        %2329 = vst [vmem:[%s231 + $0x48] sm:$0xff] %v2297
        %2330 = vst [vmem:[%s231 + $0x50] sm:$0xff] %v2298
        %2331 = vst [vmem:[%s231 + $0x58] sm:$0xff] %v2299
        %2332 = vst [vmem:[%s231 + $0x60] sm:$0xff] %v2300
        %2333 = vst [vmem:[%s231 + $0x68] sm:$0xff] %v2301
        %2334 = vst [vmem:[%s231 + $0x70] sm:$0xff] %v2302
        %2335 = vst [vmem:[%s231 + $0x78] sm:$0xff] %v2303
        %2336 = vst [vmem:[%s231 + $0x80] sm:$0xff] %v2304
        %2337 = vst [vmem:[%s231 + $0x88] sm:$0xff] %v2305
        %2338 = vst [vmem:[%s231 + $0x90] sm:$0xff] %v2306
        %2339 = vst [vmem:[%s231 + $0x98] sm:$0xff] %v2307
        %2340 = vst [vmem:[%s231 + $0xa0] sm:$0xff] %v2308
        %2341 = vst [vmem:[%s231 + $0xa8] sm:$0xff] %v2309
        %2342 = vst [vmem:[%s231 + $0xb0] sm:$0xff] %v2310
        %2343 = vst [vmem:[%s231 + $0xb8] sm:$0xff] %v2311
        %2344 = vst [vmem:[%s231 + $0xc0] sm:$0xff] %v2312
        %2345 = vst [vmem:[%s231 + $0xc8] sm:$0xff] %v2313
        %2346 = vst [vmem:[%s231 + $0xd0] sm:$0xff] %v2314
        %2347 = vst [vmem:[%s231 + $0xd8] sm:$0xff] %v2315
        %2348 = vst [vmem:[%s231 + $0xe0] sm:$0xff] %v2316
        %2349 = vst [vmem:[%s231 + $0xe8] sm:$0xff] %v2317
        %2350 = vst [vmem:[%s231 + $0xf0] sm:$0xff] %v2318
        %2351 = vst [vmem:[%s231 + $0xf8] sm:$0xff] %v2319
        %s2352 = sand.u32 %s151, 1
        %s2353 = scalar_lea.sflag [#allocation3], %s2352
        %s2354 = sand.u32 %s151, 1
        %s2355 = smul.addr %s2354, 256
        %s2356 = scalar_lea.vmem [#allocation2], %s2355
        // Predicated region
        $region41: #{tpu_custom_call.1} parent=39 // pred_check
          %p2357 = pneg %p161
        $region42: #{tpu_custom_call.1} parent=39 // pred_check_branch
          %2359 = sbr.rel (%p2357) target = $region44
        $region43: #{tpu_custom_call.1} parent=39 // pred_region
          %s2360 = smul.u32 32, %s24
          %s2362 = ssub.s32 4096, 4096
          %2363 = vsyncadd %s2353, %s2362
          %s2364 = smul.addr %s23, 32
          %s2365 = sadd.s32 %s2360, %s2364
          %s2366 = smul.addr %s2365, 128
          %s2367 = scalar_lea.hbm %s5, %s2366
          %s2368 = sshll.u32 %s2356, 4
          %s2369 = int_to_ptr.vmem [resolvable:$true] %s2368
          %2374 = dma.vmem_to_hbm [thread:$0]  %s2369, 4096, %s2367, %s2353, 128, 128, 8
        $region44: #{tpu_custom_call.1} parent=39 // pred_fallthru
          _
      $region40: #{tpu_custom_call.1} parent=5 // pred_fallthru
        _
      %p2375 = scmp.le.s32.totalorder 2, %s14
      // Predicated region
      $region45: #{tpu_custom_call.1} parent=5 // pred_check
        %p2376 = pneg %p2375
      $region46: #{tpu_custom_call.1} parent=5 // pred_check_branch
        %2378 = sbr.rel (%p2376) target = $region48
      $region47: #{tpu_custom_call.1} parent=5 // pred_region
        %s2379 = ssub.s32 %s14, 2
        // Predicated region
        $region49: #{tpu_custom_call.1} parent=47 // pred_check
          %p2380 = pneg %p167
        $region50: #{tpu_custom_call.1} parent=47 // pred_check_branch
          %2382 = sbr.rel (%p2380) target = $region52
        $region51: #{tpu_custom_call.1} parent=47 // pred_region
          %s2383 = sand.u32 %s152, 1
          %s2384 = scalar_lea.sflag [#allocation3], %s2383
          %s2385 = sand.u32 %s152, 1
          %s2386 = smul.addr %s2385, 256
          %s2387 = scalar_lea.vmem [#allocation2], %s2386
          %2388 = dma.done %s2384, 4096
        $region52: #{tpu_custom_call.1} parent=47 // pred_fallthru
          _
      $region48: #{tpu_custom_call.1} parent=5 // pred_fallthru
        _
    $region6: #{tpu_custom_call.1} parent=1 // loop_footer
      %s18 = sadd.s32 1, %s14
    $region7: #{tpu_custom_call.1} parent=1 // loop_footer_branch
      %13 = sbr.rel target = $region3
    $region8: #{tpu_custom_call.1} parent=1 // loop_exit
      _
    %2389 = vsyncpa [#allocation3], 1
    %s2390 = scalar_lea.sflag [#allocation3], 1
    %2391 = vsyncpa %s2390, 1

</llo_original>
